<compile_context>
chip_gen: v7x
topology: tpu7x:2x2x1
jax: 0.10.0
libtpu: 0.0.40
codegen_flags: <defaults>
</compile_context>

<pallas_src>
import functools
import math

import jax
import jax.numpy as jnp
from jax import lax
from jax.experimental import pallas as pl
from jax.experimental.pallas import tpu as pltpu

BN_EPS = 1e-5
_VMEM_LIMIT = 32 * 1024 * 1024


# ----------------------------------------------------------------------------
# Helpers
# ----------------------------------------------------------------------------
def _rup(n, m):
    return ((n + m - 1) // m) * m


def _pick_m_tile(m, cap):
    """Largest M tile <= cap that needs no padding (divisor of m, mult of 8)."""
    cap = max(8, (cap // 8) * 8)
    if m <= cap:
        return m, m
    for t in range(cap, 7, -1):
        if t % 8 == 0 and m % t == 0:
            return t, m
    return cap, _rup(m, cap)


# ----------------------------------------------------------------------------
# Pallas kernel 1: matmul (full K, full N) + bias + optional ReLU6 / residual
# ----------------------------------------------------------------------------
def _mm_kernel(*refs, act, has_res):
    if has_res:
        x_ref, w_ref, b_ref, r_ref, o_ref = refs
    else:
        x_ref, w_ref, b_ref, o_ref = refs
    acc = jnp.dot(x_ref[...], w_ref[...], preferred_element_type=jnp.float32)
    acc = acc + b_ref[...]
    if act == "relu6":
        acc = jnp.clip(acc, 0.0, 6.0)
    if has_res:
        acc = acc + r_ref[...].astype(jnp.float32)
    o_ref[...] = acc.astype(o_ref.dtype)


@functools.partial(jax.jit, static_argnames=("act", "out_dtype"))
def matmul_bias_act(x2d, w, bias, res=None, *, act=None, out_dtype=jnp.bfloat16):
    """x2d:[M,K] @ w:[K,N] + bias, optional ReLU6, optional residual add.

    K / N are kept as single full-dim blocks (no zero padding); only M is tiled.
    """
    M, K = x2d.shape
    N = w.shape[1]
    # TODO(synk): split N when the weight no longer fits a single VMEM block
    # (never happens for this model's layer sizes).
    assert K * N * 2 <= 8 * 1024 * 1024, "weight too large for single-block matmul"

    bytes_per_row = 2 * K * 2 + 2 * N * 2 + N * 4   # dbuf x + dbuf out + f32 acc
    cap = min(1024, max(64, (8 * 1024 * 1024) // max(bytes_per_row, 1)))
    tm, Mp = _pick_m_tile(M, cap)

    xp = x2d.astype(jnp.bfloat16)
    if Mp != M:
        xp = jnp.pad(xp, ((0, Mp - M), (0, 0)))
    wp = w.astype(jnp.bfloat16)
    bp = bias.reshape(1, N).astype(jnp.float32)

    args = [xp, wp, bp]
    in_specs = [
        pl.BlockSpec((tm, K), lambda i: (i, 0)),
        pl.BlockSpec((K, N), lambda i: (0, 0)),
        pl.BlockSpec((1, N), lambda i: (0, 0)),
    ]
    if res is not None:
        rp = res.astype(jnp.bfloat16)
        if Mp != M:
            rp = jnp.pad(rp, ((0, Mp - M), (0, 0)))
        args.append(rp)
        in_specs.append(pl.BlockSpec((tm, N), lambda i: (i, 0)))

    out = pl.pallas_call(
        functools.partial(_mm_kernel, act=act, has_res=res is not None),
        out_shape=jax.ShapeDtypeStruct((Mp, N), out_dtype),
        grid=(Mp // tm,),
        in_specs=in_specs,
        out_specs=pl.BlockSpec((tm, N), lambda i: (i, 0)),
        compiler_params=pltpu.CompilerParams(
            dimension_semantics=("parallel",),
            vmem_limit_bytes=_VMEM_LIMIT),
    )(*args)
    if Mp != M:
        out = out[:M]
    return out


def pointwise_conv_bn_act(x, w, scale, bias, act, res2d=None):
    """1x1x1 Conv3d (bias=False) + BN(eval) + optional ReLU6; x: [B,T,H,W,C]."""
    B, T, H, W, C = x.shape
    out2d = matmul_bias_act(x.reshape(B * T * H * W, C), w * scale[None, :], bias,
                            res2d, act=act)
    return out2d.reshape(B, T, H, W, -1)


# ----------------------------------------------------------------------------
# Pallas kernel 2: depthwise Conv3d + BN(eval) + ReLU6 (spatial taps in-kernel)
# ----------------------------------------------------------------------------
def _dw_kernel(x_ref, w_ref, b_ref, o_ref, *, kdims, strides, out_hw, hq):
    # x_ref block : (tmb, kt*PH*Hq, Wq, C)   bf16
    # w_ref block : (ntaps, 1, C)            f32 (BN scale folded in)
    # b_ref block : (1, C)                   f32
    # o_ref block : (tmb, Ho, Wo, C)         bf16
    kt, kh, kw = kdims
    sh, sw = strides
    Ho, Wo = out_hw
    nph = sh * sw
    acc = None
    for dt in range(kt):
        for phh in range(sh):
            if phh >= kh:
                continue
            for phw in range(sw):
                if phw >= kw:
                    continue
                base = (dt * nph + phh * sw + phw) * hq
                plane = x_ref[:, base:base + hq]          # (tmb, Hq, Wq, C)
                for dh in range(phh, kh, sh):
                    for dw in range(phw, kw, sw):
                        tap = (dt * kh + dh) * kw + dw
                        v = plane[:, dh // sh:dh // sh + Ho,
                                  dw // sw:dw // sw + Wo, :].astype(jnp.float32)
                        term = v * w_ref[tap]
                        acc = term if acc is None else acc + term
    acc = acc + b_ref[...]
    o_ref[...] = jnp.clip(acc, 0.0, 6.0).astype(o_ref.dtype)


@functools.partial(jax.jit, static_argnames=("ksize", "stride", "padding"))
def depthwise_conv_bn_relu6(x, w, scale, bias, *, ksize, stride, padding):
    """Depthwise (groups=C) Conv3d + BN(eval) + ReLU6.

    x: [B,T,H,W,C] bf16, w: [kt*kh*kw, C] per-channel taps, scale/bias: [C]."""
    B, T, H, W, C = x.shape
    kt, kh, kw = ksize
    st, sh, sw = stride
    pt, ph, pw = padding
    To = (T + 2 * pt - kt) // st + 1
    Ho = (H + 2 * ph - kh) // sh + 1
    Wo = (W + 2 * pw - kw) // sw + 1
    ntaps = kt * kh * kw
    Tp, Hp, Wp = T + 2 * pt, H + 2 * ph, W + 2 * pw
    Hp2, Wp2 = _rup(Hp, sh), _rup(Wp, sw)
    Hq, Wq = Hp2 // sh, Wp2 // sw
    PH = sh * sw
    M = B * To

    # Single pad: conv padding plus round-up so H/W divide by the spatial stride.
    xp = jnp.pad(x, ((0, 0), (pt, pt), (ph, ph + Hp2 - Hp),
                     (pw, pw + Wp2 - Wp), (0, 0)))
    # Stride-phase decomposition: pure rearrangement (no duplication); spatial
    # taps then become contiguous in-kernel slices of each phase plane.
    xq = xp.reshape(B, Tp, Hq, sh, Wq, sw, C).transpose(0, 1, 3, 5, 2, 4, 6)
    # Temporal taps: the only remaining duplication (factor kt; 1x for (1,kh,kw)).
    taps_t = [xq[:, dt:dt + (To - 1) * st + 1:st] for dt in range(kt)]
    xdw = jnp.stack(taps_t, axis=2)           # [B, To, kt, sh, sw, Hq, Wq, C]
    xdw = xdw.reshape(M, kt * PH * Hq, Wq, C).astype(jnp.bfloat16)

    wk = (w * scale[None, :]).reshape(ntaps, 1, C).astype(jnp.float32)
    bi = bias.reshape(1, C).astype(jnp.float32)

    # Adaptive row tile (divisor of M, no padding) bounded by a VMEM budget.
    Cp = _rup(C, 128)
    in_row = kt * PH * Hq * _rup(Wq, 8) * Cp * 2
    out_row = Ho * _rup(Wo, 8) * Cp * 2
    per_row = 2 * in_row + 6 * out_row
    budget = 16 * 1024 * 1024
    tmb = 1
    for d in range(min(M, 512), 0, -1):
        if M % d == 0 and d * per_row <= budget:
            tmb = d
            break

    out = pl.pallas_call(
        functools.partial(_dw_kernel, kdims=(kt, kh, kw), strides=(sh, sw),
                          out_hw=(Ho, Wo), hq=Hq),
        out_shape=jax.ShapeDtypeStruct((M, Ho, Wo, C), jnp.bfloat16),
        grid=(M // tmb,),
        in_specs=[
            pl.BlockSpec((tmb, kt * PH * Hq, Wq, C), lambda i: (i, 0, 0, 0)),
            pl.BlockSpec((ntaps, 1, C), lambda i: (0, 0, 0)),
            pl.BlockSpec((1, C), lambda i: (0, 0)),
        ],
        out_specs=pl.BlockSpec((tmb, Ho, Wo, C), lambda i: (i, 0, 0, 0)),
        compiler_params=pltpu.CompilerParams(
            dimension_semantics=("parallel",),
            vmem_limit_bytes=_VMEM_LIMIT),
    )(xdw, wk, bi)
    return out.reshape(B, To, Ho, Wo, C)


# ----------------------------------------------------------------------------
# Full (non-grouped) Conv3d via im2col + matmul kernel (stems, Cin=3)
# ----------------------------------------------------------------------------
@functools.partial(jax.jit, static_argnames=("ksize", "stride", "padding", "act"))
def conv3d_bn_act(x, w, scale, bias, *, ksize, stride, padding, act):
    """Regular Conv3d (bias=False) + BN(eval) + act.  w: [kt*kh*kw*Cin, Cout]."""
    B, T, H, W, C = x.shape
    kt, kh, kw = ksize
    st, sh, sw = stride
    pt, ph, pw = padding
    To = (T + 2 * pt - kt) // st + 1
    Ho = (H + 2 * ph - kh) // sh + 1
    Wo = (W + 2 * pw - kw) // sw + 1
    M = B * To * Ho * Wo
    xp = jnp.pad(x, ((0, 0), (pt, pt), (ph, ph), (pw, pw), (0, 0)))
    cols = []
    for a in range(kt):
        for b in range(kh):
            for c in range(kw):
                sl = lax.slice(
                    xp,
                    (0, a, b, c, 0),
                    (B, a + (To - 1) * st + 1, b + (Ho - 1) * sh + 1,
                     c + (Wo - 1) * sw + 1, C),
                    (1, st, sh, sw, 1))
                cols.append(sl.reshape(M, C))
    patches = jnp.concatenate(cols, axis=1)   # [M, ntaps*Cin]
    out2d = matmul_bias_act(patches, w * scale[None, :], bias, act=act)
    return out2d.reshape(B, To, Ho, Wo, -1)


# ----------------------------------------------------------------------------
# Pallas kernel 3: global average pool over (T, H, W)
# ----------------------------------------------------------------------------
def _gap_kernel(x_ref, o_ref, acc_ref, *, inv_p):
    @pl.when(pl.program_id(0) == 0)
    def _():
        acc_ref[...] = jnp.zeros_like(acc_ref)

    acc_ref[...] += jnp.sum(x_ref[...].astype(jnp.float32), axis=1)

    @pl.when(pl.program_id(0) == pl.num_programs(0) - 1)
    def _():
        o_ref[...] = acc_ref[...] * inv_p


@jax.jit
def global_avg_pool(x):
    B, T, H, W, C = x.shape
    P = T * H * W
    x3 = x.reshape(B, P, C)
    cap = 1024
    if P <= cap:
        tp, Pp = P, P
    else:
        tp = None
        for t in range(cap, 7, -1):
            if t % 8 == 0 and P % t == 0:
                tp = t
                break
        if tp is None:
            tp = cap
            Pp = _rup(P, tp)
            x3 = jnp.pad(x3, ((0, 0), (0, Pp - P), (0, 0)))
        else:
            Pp = P
    out = pl.pallas_call(
        functools.partial(_gap_kernel, inv_p=1.0 / P),
        out_shape=jax.ShapeDtypeStruct((B, C), jnp.float32),
        grid=(Pp // tp,),
        in_specs=[pl.BlockSpec((B, tp, C), lambda j: (0, j, 0))],
        out_specs=pl.BlockSpec((B, C), lambda j: (0, 0)),
        scratch_shapes=[pltpu.VMEM((B, C), jnp.float32)],
        compiler_params=pltpu.CompilerParams(dimension_semantics=("arbitrary",)),
    )(x3)
    return out


# ----------------------------------------------------------------------------
# Parameter construction (deterministic, mirrors the PyTorch _initialize_weights)
# ----------------------------------------------------------------------------
class _KeyGen:
    def __init__(self, key):
        self._key = key

    def __call__(self):
        self._key, sub = jax.random.split(self._key)
        return sub


def _conv_w(kg, shape, n):
    return jax.random.normal(kg(), shape, jnp.float32) * math.sqrt(2.0 / n)


def _bn(c):
    scale = jnp.full((c,), 1.0 / math.sqrt(1.0 + BN_EPS), jnp.float32)
    bias = jnp.zeros((c,), jnp.float32)
    return scale, bias


def init_block(kg, inp, oup, stride, expand_ratio, dw_ksize, padding):
    hidden = int(round(inp * expand_ratio))
    kt, kh, kw = dw_ksize
    p = {
        "t": expand_ratio,
        "k": tuple(dw_ksize),
        "stride": tuple(stride),
        "pad": tuple(padding),
        "use_res": (tuple(stride) == (1, 1, 1) and inp == oup),
    }
    if expand_ratio != 1:
        p["pw1_w"] = _conv_w(kg, (inp, hidden), hidden)
        p["pw1_s"], p["pw1_b"] = _bn(hidden)
    p["dw_w"] = _conv_w(kg, (kt * kh * kw, hidden), kt * kh * kw * hidden)
    p["dw_s"], p["dw_b"] = _bn(hidden)
    p["pw2_w"] = _conv_w(kg, (hidden, oup), oup)
    p["pw2_s"], p["pw2_b"] = _bn(oup)
    return p


def block_fwd(p, x):
    B, T, H, W, C = x.shape
    h = x
    if p["t"] != 1:
        h = pointwise_conv_bn_act(h, p["pw1_w"], p["pw1_s"], p["pw1_b"], "relu6")
    h = depthwise_conv_bn_relu6(h, p["dw_w"], p["dw_s"], p["dw_b"],
                                ksize=p["k"], stride=p["stride"], padding=p["pad"])
    res2d = x.reshape(B * T * H * W, C) if p["use_res"] else None
    Bo, To, Ho, Wo, Ch = h.shape
    out2d = matmul_bias_act(h.reshape(Bo * To * Ho * Wo, Ch),
                            p["pw2_w"] * p["pw2_s"][None, :], p["pw2_b"],
                            res2d, act=None)
    return out2d.reshape(Bo, To, Ho, Wo, -1)


def build_model(key, num_classes=1000, sample_size=112, width_mult_slow=1.0,
                beta=0.2, fusion_kernel_size=5, fusion_conv_channel_ratio=2,
                slow_frames=4, fast_frames=16,
                lateral_connection_section_indices=(0, 2, 3, 4),
                input_channel=32, last_channel=1280):
    assert sample_size % 16 == 0
    assert fast_frames % slow_frames == 0
    kg = _KeyGen(key)
    alpha = fast_frames // slow_frames
    wm_fast = width_mult_slow * beta

    cfg_fast = [[1, 16, 1, (1, 1, 1)], [6, 24, 2, (1, 2, 2)], [6, 32, 3, (1, 2, 2)],
                [6, 64, 4, (1, 2, 2)], [6, 96, 3, (1, 1, 1)], [6, 160, 3, (1, 2, 2)],
                [6, 320, 1, (1, 1, 1)]]
    cfg_slow = [[1, 16, 1, (1, 1, 1), (1, 3, 3)], [6, 24, 2, (1, 2, 2), (1, 3, 3)],
                [6, 32, 3, (1, 2, 2), (1, 3, 3)], [6, 64, 4, (1, 2, 2), (1, 3, 3)],
                [6, 96, 3, (1, 1, 1), (1, 3, 3)], [6, 160, 3, (1, 2, 2), (3, 3, 3)],
                [6, 320, 1, (1, 1, 1), (3, 3, 3)]]

    model = {"alpha": alpha,
             "lateral_idx": tuple(lateral_connection_section_indices)}

    # ---- fast pathway ----
    in_c = int(input_channel * wm_fast)
    fast_last_c = int(last_channel * wm_fast)
    s_, b_ = _bn(in_c)
    model["fast_first"] = {"w": _conv_w(kg, (27 * 3, in_c), 27 * in_c), "s": s_, "b": b_}
    fast_sections, laterals, lateral_channels = [], [], []
    for si, (t, c, n, s) in enumerate(cfg_fast):
        if si in model["lateral_idx"]:
            lat_out = in_c * fusion_conv_channel_ratio
            lateral_channels.append(lat_out)
            laterals.append(init_block(kg, in_c, lat_out, (alpha, 1, 1), t,
                                       (fusion_kernel_size, 1, 1),
                                       (fusion_kernel_size // 2, 0, 0)))
        else:
            lateral_channels.append(None)
            laterals.append(None)
        out_c = int(c * wm_fast)
        blocks = []
        for i in range(n):
            stride = s if i == 0 else (1, 1, 1)
            blocks.append(init_block(kg, in_c, out_c, stride, t, (3, 3, 3), (1, 1, 1)))
            in_c = out_c
        fast_sections.append(blocks)
    model["fast_sections"] = fast_sections
    model["laterals"] = laterals
    s_, b_ = _bn(fast_last_c)
    model["fast_last"] = {"w": _conv_w(kg, (in_c, fast_last_c), fast_last_c),
                          "s": s_, "b": b_}
    model["fast_last_channel"] = fast_last_c

    # ---- slow pathway ----
    in_c = int(input_channel * width_mult_slow)
    slow_last_c = int(last_channel * width_mult_slow)
    s_, b_ = _bn(in_c)
    model["slow_first"] = {"w": _conv_w(kg, (27 * 3, in_c), 27 * in_c), "s": s_, "b": b_}
    slow_sections = []
    for si, (t, c, n, s, k) in enumerate(cfg_slow):
        out_c = int(c * width_mult_slow)
        if lateral_channels[si] is not None:
            in_c += lateral_channels[si]
        blocks = []
        for i in range(n):
            stride = s if i == 0 else (1, 1, 1)
            padding = (k[0] // 2, k[1] // 2, k[2] // 2)
            blocks.append(init_block(kg, in_c, out_c, stride, t, k, padding))
            in_c = out_c
        slow_sections.append(blocks)
    model["slow_sections"] = slow_sections
    s_, b_ = _bn(slow_last_c)
    model["slow_last"] = {"w": _conv_w(kg, (in_c, slow_last_c), slow_last_c),
                          "s": s_, "b": b_}
    model["slow_last_channel"] = slow_last_c

    fused = fast_last_c + slow_last_c
    model["cls_w"] = jax.random.normal(kg(), (fused, num_classes), jnp.float32) * 0.01
    model["cls_b"] = jnp.zeros((num_classes,), jnp.float32)
    return model


# ----------------------------------------------------------------------------
# Forward pass (mirrors SlowFastMobileNetV2.forward)
# ----------------------------------------------------------------------------
def forward(model, x_ncthw):
    # PyTorch input layout NCTHW -> internal NTHWC, bf16 activations end-to-end.
    x = jnp.transpose(x_ncthw, (0, 2, 3, 4, 1)).astype(jnp.bfloat16)
    alpha = model["alpha"]
    slow_x = x[:, ::alpha]  # every alpha-th frame

    # ---- fast pathway (collects lateral features) ----
    f = model["fast_first"]
    h = conv3d_bn_act(x, f["w"], f["s"], f["b"], ksize=(3, 3, 3),
                      stride=(1, 2, 2), padding=(1, 1, 1), act="relu6")
    lateral_feats = []
    for si, blocks in enumerate(model["fast_sections"]):
        if si in model["lateral_idx"]:
            lateral_feats.append(block_fwd(model["laterals"][si], h))
        else:
            lateral_feats.append(None)
        for bp in blocks:
            h = block_fwd(bp, h)
    fl = model["fast_last"]
    h = pointwise_conv_bn_act(h, fl["w"], fl["s"], fl["b"], "relu6")
    fast_out = global_avg_pool(h)  # [B, fast_last_channel]

    # ---- slow pathway (consumes lateral features) ----
    sf = model["slow_first"]
    g = conv3d_bn_act(slow_x, sf["w"], sf["s"], sf["b"], ksize=(3, 3, 3),
                      stride=(1, 2, 2), padding=(1, 1, 1), act="relu6")
    for si, blocks in enumerate(model["slow_sections"]):
        if si in model["lateral_idx"]:
            g = jnp.concatenate([g, lateral_feats[si]], axis=-1)
        for bp in blocks:
            g = block_fwd(bp, g)
    sl = model["slow_last"]
    g = pointwise_conv_bn_act(g, sl["w"], sl["s"], sl["b"], "relu6")
    slow_out = global_avg_pool(g)  # [B, slow_last_channel]

    fused = jnp.concatenate([fast_out, slow_out], axis=1)
    # classifier: Dropout -> identity (inference); Linear via the matmul kernel
    logits = matmul_bias_act(fused, model["cls_w"], model["cls_b"],
                             act=None, out_dtype=jnp.float32)
    return logits


# ----------------------------------------------------------------------------
if __name__ == "__main__":
    key = jax.random.PRNGKey(0)
    pkey, xkey = jax.random.split(key)

    # Small shapes consistent with the module: sample_size=16 (%16==0),
    # fast_frames=16, slow_frames=4, batch=2, RGB input.
    model = build_model(pkey, num_classes=1000, sample_size=16,
                        slow_frames=4, fast_frames=16)
    x = jax.random.normal(xkey, (2, 3, 16, 16, 16), jnp.float32)  # [B, C, T, H, W]

    out = forward(model, x)
    out = jax.block_until_ready(out)

    assert out.shape == (2, 1000), out.shape
    assert bool(jnp.all(jnp.isfinite(out)))
    print("KERNEL_OK")
</pallas_src>

<mosaic_0001>
module attributes {stable_mosaic.version = 11 : i64} {
  func.func @_mm_kernel(%arg0: i32, %arg1: memref<1024x81xbf16, #tpu.memory_space<vmem>>, %arg2: memref<81x6xbf16, #tpu.memory_space<vmem>>, %arg3: memref<1x6xf32, #tpu.memory_space<vmem>>, %arg4: memref<1024x6xbf16, #tpu.memory_space<vmem>>) attributes {dimension_semantics = [#tpu.dimension_semantics<parallel>], iteration_bounds = array<i64: 2>, scalar_prefetch = 0 : i64, scratch_operands = 0 : i64, tpu.core_type = #tpu.core_type<tc>, window_params = [{transform_indices = @transform_0, window_bounds = array<i64: 1024, 81>}, {pipeline_mode = #tpu.pipeline_mode<synchronous>, transform_indices = @transform_1, window_bounds = array<i64: 81, 6>}, {pipeline_mode = #tpu.pipeline_mode<synchronous>, transform_indices = @transform_2, window_bounds = array<i64: 1, 6>}, {transform_indices = @transform_3, window_bounds = array<i64: 1024, 6>}]} {
    %c0 = arith.constant 0 : index
    %c0_0 = arith.constant 0 : index
    %0 = vector.load %arg1[%c0, %c0_0] : memref<1024x81xbf16, #tpu.memory_space<vmem>>, vector<1024x81xbf16>
    %c0_1 = arith.constant 0 : index
    %c0_2 = arith.constant 0 : index
    %1 = vector.load %arg2[%c0_1, %c0_2] : memref<81x6xbf16, #tpu.memory_space<vmem>>, vector<81x6xbf16>
    %cst = arith.constant dense<0.000000e+00> : vector<1024x6xf32>
    %2 = tpu.matmul %0, %1, %cst {dimension_numbers = #tpu.dot_dimension_numbers<[1], [0], [0], [1], [0, 0, 1, 1], [], []>} : vector<1024x81xbf16>, vector<81x6xbf16>, vector<1024x6xf32> -> vector<1024x6xf32>
    %c0_3 = arith.constant 0 : index
    %c0_4 = arith.constant 0 : index
    %3 = vector.load %arg3[%c0_3, %c0_4] : memref<1x6xf32, #tpu.memory_space<vmem>>, vector<1x6xf32>
    %4 = vector.broadcast %3 : vector<1x6xf32> to vector<1024x6xf32>
    %5 = arith.addf %2, %4 : vector<1024x6xf32>
    %cst_5 = arith.constant 0.000000e+00 : f32
    %cst_6 = arith.constant 6.000000e+00 : f32
    %6 = vector.broadcast %cst_5 : f32 to vector<1024x6xf32>
    %7 = arith.maximumf %6, %5 : vector<1024x6xf32>
    %8 = vector.broadcast %cst_6 : f32 to vector<1024x6xf32>
    %9 = arith.minimumf %8, %7 : vector<1024x6xf32>
    %10 = arith.truncf %9 : vector<1024x6xf32> to vector<1024x6xbf16>
    %c0_7 = arith.constant 0 : index
    %c0_8 = arith.constant 0 : index
    %11 = vector.load %arg4[%c0_7, %c0_8] : memref<1024x6xbf16, #tpu.memory_space<vmem>>, vector<1024x6xbf16>
    tpu.vector_store %arg4[%c0_7, %c0_8], %10 {strides = array<i32>} : memref<1024x6xbf16, #tpu.memory_space<vmem>>, vector<1024x6xbf16>,
    return
  }
  func.func @transform_0(%arg0: i32) -> (i32, i32) {
    %c0_i32 = arith.constant 0 : i32
    %c0_i32_0 = arith.constant 0 : i32
    return %arg0, %c0_i32 : i32, i32
  }
  func.func @transform_1(%arg0: i32) -> (i32, i32) {
    %c0_i32 = arith.constant 0 : i32
    %c0_i32_0 = arith.constant 0 : i32
    %c0_i32_1 = arith.constant 0 : i32
    return %c0_i32, %c0_i32_0 : i32, i32
  }
  func.func @transform_2(%arg0: i32) -> (i32, i32) {
    %c0_i32 = arith.constant 0 : i32
    %c0_i32_0 = arith.constant 0 : i32
    %c0_i32_1 = arith.constant 0 : i32
    return %c0_i32, %c0_i32_0 : i32, i32
  }
  func.func @transform_3(%arg0: i32) -> (i32, i32) {
    %c0_i32 = arith.constant 0 : i32
    %c0_i32_0 = arith.constant 0 : i32
    return %arg0, %c0_i32 : i32, i32
  }
}

</mosaic_0001>

<llo_original>
// kernel: matmul_bias_act.1
$region0: #{matmul_bias_act.1}
  #allocation0 [shape = 'u32[]', space=smem, size = 0x4, offset = 0x4, fixed_abs, tag = 'smem constant byte address 0x4 - core index']
  #allocation1 [shape = 'u32[144,128]{1,0:T(1,128)}', space=vmem, size = 0x12000, scoped, tag = 'internal scratch']
  %s0 = inlined_call_operand.vmem [shape: bf16[2048,81], index: 0, kind: input, shape index: {}]
  %s1 = inlined_call_operand.vmem [shape: bf16[81,6], index: 1, kind: input, shape index: {}]
  %s2 = inlined_call_operand.vmem [shape: f32[1,6], index: 2, kind: input, shape index: {}]
  %s3 = inlined_call_operand.vmem [shape: bf16[2048,6], index: 3, kind: output, shape index: {}]
  %s4 = sld [smem:[#allocation0]]
  $region45: #{matmul_bias_act.1} parent=0
    _
  %s6 = ssub.s32 1, %s4
  %s7 = scalar_select 0, %s6, %s4
  loop: start=0, step=1, limit=4
  $region2: #{matmul_bias_act.1} parent=0 // loop_pre_header
    _
  $region3: #{matmul_bias_act.1} parent=0 // loop_header
    %s9 = sphi 0, %s13
    %p10 = scmp.ge.s32.totalorder %s9, 4
    %s19 = sphi 0, %s21
    %s22 = sphi 0, %s19
    %s23 = sphi 0, %s22
    %s39 = sphi 0, %s23
    %s43 = sphi 0, %s43
    %s45 = sphi 0, %s43
    %s46 = sphi 0, %s45
    %s60 = sphi 0, %s46
    %s64 = sphi 0, %s64
    %s66 = sphi 0, %s64
    %s67 = sphi 0, %s66
    %s81 = sphi 0, %s67
    %s87 = sphi 0, %s89
    %s90 = sphi 0, %s87
    %s91 = sphi 0, %s90
    %s107 = sphi 0, %s91
  $region4: #{matmul_bias_act.1} parent=0 // loop_header_branch
    %12 = sbr.rel (%p10) target = $region8
  $region5: #{matmul_bias_act.1} parent=0 // loop_body
    %s14 = ssub.s32 %s9, 1
    %s15 = ssub.s32 %s9, 2
    %s16 = sadd.s32 %s9, 1
    %s17 = ssub.s32 %s9, %s16
    %p18 = scmp.eq.s32.totalorder %s17, 0
    %s20 = sadd.s32 %s19, 1
    %s21 = scalar_select %p18, %s19, %s20
    %p24 = pneg %p18
    %p25 = scmp.eq.s32.totalorder %s9, 1
    %p26 = por %p24, %p25
    %p27 = scmp.ne.s32.totalorder %s19, %s22
    %p28 = scmp.eq.s32.totalorder %s9, 0
    %p29 = por %p27, %p28
    %p30 = scmp.ne.s32.totalorder %s19, %s22
    %p31 = scmp.eq.s32.totalorder %s14, 1
    %p32 = por %p30, %p31
    %p33 = scmp.ne.s32.totalorder %s22, %s23
    %p34 = scmp.eq.s32.totalorder %s14, 0
    %p35 = por %p33, %p34
    %p36 = scmp.ne.s32.totalorder %s22, %s23
    %p37 = scmp.eq.s32.totalorder %s15, 1
    %p38 = por %p36, %p37
    %p40 = scmp.ne.s32.totalorder %s23, %s39
    %p41 = scmp.eq.s32.totalorder %s15, 0
    %p42 = por %p40, %p41
    %s44 = sadd.s32 %s43, 1
    %p47 = scmp.eq.s32.totalorder %s9, 1
    %p48 = scmp.ne.s32.totalorder %s43, %s45
    %p49 = scmp.eq.s32.totalorder %s9, 0
    %p50 = por %p48, %p49
    %p51 = scmp.ne.s32.totalorder %s43, %s45
    %p52 = scmp.eq.s32.totalorder %s14, 1
    %p53 = por %p51, %p52
    %p54 = scmp.ne.s32.totalorder %s45, %s46
    %p55 = scmp.eq.s32.totalorder %s14, 0
    %p56 = por %p54, %p55
    %p57 = scmp.ne.s32.totalorder %s45, %s46
    %p58 = scmp.eq.s32.totalorder %s15, 1
    %p59 = por %p57, %p58
    %p61 = scmp.ne.s32.totalorder %s46, %s60
    %p62 = scmp.eq.s32.totalorder %s15, 0
    %p63 = por %p61, %p62
    %s65 = sadd.s32 %s64, 1
    %p68 = scmp.eq.s32.totalorder %s9, 1
    %p69 = scmp.ne.s32.totalorder %s64, %s66
    %p70 = scmp.eq.s32.totalorder %s9, 0
    %p71 = por %p69, %p70
    %p72 = scmp.ne.s32.totalorder %s64, %s66
    %p73 = scmp.eq.s32.totalorder %s14, 1
    %p74 = por %p72, %p73
    %p75 = scmp.ne.s32.totalorder %s66, %s67
    %p76 = scmp.eq.s32.totalorder %s14, 0
    %p77 = por %p75, %p76
    %p78 = scmp.ne.s32.totalorder %s66, %s67
    %p79 = scmp.eq.s32.totalorder %s15, 1
    %p80 = por %p78, %p79
    %p82 = scmp.ne.s32.totalorder %s67, %s81
    %p83 = scmp.eq.s32.totalorder %s15, 0
    %p84 = por %p82, %p83
    %s85 = ssub.s32 %s9, %s16
    %p86 = scmp.eq.s32.totalorder %s85, 0
    %s88 = sadd.s32 %s87, 1
    %s89 = scalar_select %p86, %s87, %s88
    %p92 = pneg %p86
    %p93 = scmp.eq.s32.totalorder %s9, 1
    %p94 = por %p92, %p93
    %p95 = scmp.ne.s32.totalorder %s87, %s90
    %p96 = scmp.eq.s32.totalorder %s9, 0
    %p97 = por %p95, %p96
    %p98 = scmp.ne.s32.totalorder %s87, %s90
    %p99 = scmp.eq.s32.totalorder %s14, 1
    %p100 = por %p98, %p99
    %p101 = scmp.ne.s32.totalorder %s90, %s91
    %p102 = scmp.eq.s32.totalorder %s14, 0
    %p103 = por %p101, %p102
    %p104 = scmp.ne.s32.totalorder %s90, %s91
    %p105 = scmp.eq.s32.totalorder %s15, 1
    %p106 = por %p104, %p105
    %p108 = scmp.ne.s32.totalorder %s91, %s107
    %p109 = scmp.eq.s32.totalorder %s15, 0
    %p110 = por %p108, %p109
    %p111 = scmp.le.s32.totalorder 1, %s9
    %p112 = scmp.lt.s32.totalorder %s9, 3
    %p113 = pnand %p111, %p112
    %p114 = pneg %p113
    // Predicated region
    $region9: #{matmul_bias_act.1} parent=5 // pred_check
      _
    $region10: #{matmul_bias_act.1} parent=5 // pred_check_branch
      %116 = sbr.rel (%p113) target = $region12
    $region11: #{matmul_bias_act.1} parent=5 // pred_region
      %s117 = ssub.s32 %s9, 1
      // Predicated region
      $region13: #{matmul_bias_act.1} parent=11 // pred_check
        %p118 = pneg %p56
      $region14: #{matmul_bias_act.1} parent=11 // pred_check_branch
        %120 = sbr.rel (%p118) target = $region16
      $region15: #{matmul_bias_act.1} parent=11 // pred_region
        _
      $region16: #{matmul_bias_act.1} parent=11 // pred_fallthru
        _
      // Predicated region
      $region17: #{matmul_bias_act.1} parent=11 // pred_check
        %p121 = pneg %p77
      $region18: #{matmul_bias_act.1} parent=11 // pred_check_branch
        %123 = sbr.rel (%p121) target = $region20
      $region19: #{matmul_bias_act.1} parent=11 // pred_region
        _
      $region20: #{matmul_bias_act.1} parent=11 // pred_fallthru
        _
    $region12: #{matmul_bias_act.1} parent=5 // pred_fallthru
      _
    %p124 = scmp.lt.s32.totalorder %s9, 2
    // Predicated region
    $region21: #{matmul_bias_act.1} parent=5 // pred_check
      %p125 = pneg %p124
    $region22: #{matmul_bias_act.1} parent=5 // pred_check_branch
      %127 = sbr.rel (%p125) target = $region24
    $region23: #{matmul_bias_act.1} parent=5 // pred_region
      // Predicated region
      $region25: #{matmul_bias_act.1} parent=23 // pred_check
        %p128 = pneg %p29
      $region26: #{matmul_bias_act.1} parent=23 // pred_check_branch
        %130 = sbr.rel (%p128) target = $region28
      $region27: #{matmul_bias_act.1} parent=23 // pred_region
        %s131 = smul.u32 128, %s9
        %p132 = scmp.lt.s32.totalorder %s131, 255
        %s133 = scalar_select %p132, %s131, 255
        %s134 = smul.addr %s133, 4
        %s135 = scalar_lea.vmem %s0, %s134
        %s136 = smul.u32 128, %s9
      $region28: #{matmul_bias_act.1} parent=23 // pred_fallthru
        _
    $region24: #{matmul_bias_act.1} parent=5 // pred_fallthru
      _
    %p137 = scmp.le.s32.totalorder 1, %s9
    %p138 = scmp.lt.s32.totalorder %s9, 3
    %p139 = pnand %p137, %p138
    %p140 = pneg %p139
    // Predicated region
    $region29: #{matmul_bias_act.1} parent=5 // pred_check
      _
    $region30: #{matmul_bias_act.1} parent=5 // pred_check_branch
      %142 = sbr.rel (%p139) target = $region32
    $region31: #{matmul_bias_act.1} parent=5 // pred_region
      %s143 = ssub.s32 %s9, 1
      %s144 = smul.u32 128, %s14
      %p145 = scmp.lt.s32.totalorder %s144, 255
      %s146 = scalar_select %p145, %s144, 255
      %s147 = smul.addr %s146, 4
      %s148 = scalar_lea.vmem %s0, %s147
      %p149 = pneg %p35
      %p150 = pneg %p32
      %p151 = pneg %p56
      %p152 = pneg %p53
      %p153 = pneg %p77
      %p154 = pneg %p74
      %p155 = pneg %p103
      %p156 = pneg %p100
      %s157 = smul.u32 128, %s14
      %p158 = scmp.lt.s32.totalorder %s157, 255
      %s159 = scalar_select %p158, %s157, 255
      %s160 = smul.addr %s159, 4
      %s161 = scalar_lea.vmem %s3, %s160
      %s162 = smul.u32 128, %s14
      %p163 = scmp.lt.s32.totalorder %s162, 255
      %s164 = scalar_select %p163, %s162, 255
      %s165 = smul.addr %s164, 4
      %s166 = scalar_lea.vmem %s0, %s165
      %s167 = smul.u32 128, %s14
      %s168 = smul.u32 128, %s14
      %p169 = scmp.lt.s32.totalorder %s168, 255
      %s170 = scalar_select %p169, %s168, 255
      %s171 = smul.addr %s170, 4
      %s172 = scalar_lea.vmem %s3, %s171
      %s173 = smul.u32 128, %s14
      %v175 = vld [vmem:[%s166] sm:$0xf]
      %v176 = vld [vmem:[%s166 + $0x4] sm:$0xf]
      %v177 = vld [vmem:[%s166 + $0x8] sm:$0xf]
      %v178 = vld [vmem:[%s166 + $0xc] sm:$0xf]
      %v179 = vld [vmem:[%s166 + $0x10] sm:$0xf]
      %v180 = vld [vmem:[%s166 + $0x14] sm:$0xf]
      %v181 = vld [vmem:[%s166 + $0x18] sm:$0xf]
      %v182 = vld [vmem:[%s166 + $0x1c] sm:$0xf]
      %v183 = vld [vmem:[%s166 + $0x20] sm:$0xf]
      %v184 = vld [vmem:[%s166 + $0x24] sm:$0xf]
      %v185 = vld [vmem:[%s166 + $0x28] sm:$0xf]
      %v186 = vld [vmem:[%s166 + $0x2c] sm:$0xf]
      %v187 = vld [vmem:[%s166 + $0x30] sm:$0xf]
      %v188 = vld [vmem:[%s166 + $0x34] sm:$0xf]
      %v189 = vld [vmem:[%s166 + $0x38] sm:$0xf]
      %v190 = vld [vmem:[%s166 + $0x3c] sm:$0xf]
      %v191 = vld [vmem:[%s166 + $0x40] sm:$0xf]
      %v192 = vld [vmem:[%s166 + $0x44] sm:$0xf]
      %v193 = vld [vmem:[%s166 + $0x48] sm:$0xf]
      %v194 = vld [vmem:[%s166 + $0x4c] sm:$0xf]
      %v195 = vld [vmem:[%s166 + $0x50] sm:$0xf]
      %v196 = vld [vmem:[%s166 + $0x54] sm:$0xf]
      %v197 = vld [vmem:[%s166 + $0x58] sm:$0xf]
      %v198 = vld [vmem:[%s166 + $0x5c] sm:$0xf]
      %v199 = vld [vmem:[%s166 + $0x60] sm:$0xf]
      %v200 = vld [vmem:[%s166 + $0x64] sm:$0xf]
      %v201 = vld [vmem:[%s166 + $0x68] sm:$0xf]
      %v202 = vld [vmem:[%s166 + $0x6c] sm:$0xf]
      %v203 = vld [vmem:[%s166 + $0x70] sm:$0xf]
      %v204 = vld [vmem:[%s166 + $0x74] sm:$0xf]
      %v205 = vld [vmem:[%s166 + $0x78] sm:$0xf]
      %v206 = vld [vmem:[%s166 + $0x7c] sm:$0xf]
      %v207 = vld [vmem:[%s166 + $0x80] sm:$0xf]
      %v208 = vld [vmem:[%s166 + $0x84] sm:$0xf]
      %v209 = vld [vmem:[%s166 + $0x88] sm:$0xf]
      %v210 = vld [vmem:[%s166 + $0x8c] sm:$0xf]
      %v211 = vld [vmem:[%s166 + $0x90] sm:$0xf]
      %v212 = vld [vmem:[%s166 + $0x94] sm:$0xf]
      %v213 = vld [vmem:[%s166 + $0x98] sm:$0xf]
      %v214 = vld [vmem:[%s166 + $0x9c] sm:$0xf]
      %v215 = vld [vmem:[%s166 + $0xa0] sm:$0xf]
      %v216 = vld [vmem:[%s166 + $0xa4] sm:$0xf]
      %v217 = vld [vmem:[%s166 + $0xa8] sm:$0xf]
      %v218 = vld [vmem:[%s166 + $0xac] sm:$0xf]
      %v219 = vld [vmem:[%s166 + $0xb0] sm:$0xf]
      %v220 = vld [vmem:[%s166 + $0xb4] sm:$0xf]
      %v221 = vld [vmem:[%s166 + $0xb8] sm:$0xf]
      %v222 = vld [vmem:[%s166 + $0xbc] sm:$0xf]
      %v223 = vld [vmem:[%s166 + $0xc0] sm:$0xf]
      %v224 = vld [vmem:[%s166 + $0xc4] sm:$0xf]
      %v225 = vld [vmem:[%s166 + $0xc8] sm:$0xf]
      %v226 = vld [vmem:[%s166 + $0xcc] sm:$0xf]
      %v227 = vld [vmem:[%s166 + $0xd0] sm:$0xf]
      %v228 = vld [vmem:[%s166 + $0xd4] sm:$0xf]
      %v229 = vld [vmem:[%s166 + $0xd8] sm:$0xf]
      %v230 = vld [vmem:[%s166 + $0xdc] sm:$0xf]
      %v231 = vld [vmem:[%s166 + $0xe0] sm:$0xf]
      %v232 = vld [vmem:[%s166 + $0xe4] sm:$0xf]
      %v233 = vld [vmem:[%s166 + $0xe8] sm:$0xf]
      %v234 = vld [vmem:[%s166 + $0xec] sm:$0xf]
      %v235 = vld [vmem:[%s166 + $0xf0] sm:$0xf]
      %v236 = vld [vmem:[%s166 + $0xf4] sm:$0xf]
      %v237 = vld [vmem:[%s166 + $0xf8] sm:$0xf]
      %v238 = vld [vmem:[%s166 + $0xfc] sm:$0xf]
      %v239 = vld [vmem:[%s166 + $0x100] sm:$0xf]
      %v240 = vld [vmem:[%s166 + $0x104] sm:$0xf]
      %v241 = vld [vmem:[%s166 + $0x108] sm:$0xf]
      %v242 = vld [vmem:[%s166 + $0x10c] sm:$0xf]
      %v243 = vld [vmem:[%s166 + $0x110] sm:$0xf]
      %v244 = vld [vmem:[%s166 + $0x114] sm:$0xf]
      %v245 = vld [vmem:[%s166 + $0x118] sm:$0xf]
      %v246 = vld [vmem:[%s166 + $0x11c] sm:$0xf]
      %v247 = vld [vmem:[%s166 + $0x120] sm:$0xf]
      %v248 = vld [vmem:[%s166 + $0x124] sm:$0xf]
      %v249 = vld [vmem:[%s166 + $0x128] sm:$0xf]
      %v250 = vld [vmem:[%s166 + $0x12c] sm:$0xf]
      %v251 = vld [vmem:[%s166 + $0x130] sm:$0xf]
      %v252 = vld [vmem:[%s166 + $0x134] sm:$0xf]
      %v253 = vld [vmem:[%s166 + $0x138] sm:$0xf]
      %v254 = vld [vmem:[%s166 + $0x13c] sm:$0xf]
      %v255 = vld [vmem:[%s166 + $0x140] sm:$0xf]
      %v256 = vld [vmem:[%s166 + $0x144] sm:$0xf]
      %v257 = vld [vmem:[%s166 + $0x148] sm:$0xf]
      %v258 = vld [vmem:[%s166 + $0x14c] sm:$0xf]
      %v259 = vld [vmem:[%s166 + $0x150] sm:$0xf]
      %v260 = vld [vmem:[%s166 + $0x154] sm:$0xf]
      %v261 = vld [vmem:[%s166 + $0x158] sm:$0xf]
      %v262 = vld [vmem:[%s166 + $0x15c] sm:$0xf]
      %v263 = vld [vmem:[%s166 + $0x160] sm:$0xf]
      %v264 = vld [vmem:[%s166 + $0x164] sm:$0xf]
      %v265 = vld [vmem:[%s166 + $0x168] sm:$0xf]
      %v266 = vld [vmem:[%s166 + $0x16c] sm:$0xf]
      %v267 = vld [vmem:[%s166 + $0x170] sm:$0xf]
      %v268 = vld [vmem:[%s166 + $0x174] sm:$0xf]
      %v269 = vld [vmem:[%s166 + $0x178] sm:$0xf]
      %v270 = vld [vmem:[%s166 + $0x17c] sm:$0xf]
      %v271 = vld [vmem:[%s166 + $0x180] sm:$0xf]
      %v272 = vld [vmem:[%s166 + $0x184] sm:$0xf]
      %v273 = vld [vmem:[%s166 + $0x188] sm:$0xf]
      %v274 = vld [vmem:[%s166 + $0x18c] sm:$0xf]
      %v275 = vld [vmem:[%s166 + $0x190] sm:$0xf]
      %v276 = vld [vmem:[%s166 + $0x194] sm:$0xf]
      %v277 = vld [vmem:[%s166 + $0x198] sm:$0xf]
      %v278 = vld [vmem:[%s166 + $0x19c] sm:$0xf]
      %v279 = vld [vmem:[%s166 + $0x1a0] sm:$0xf]
      %v280 = vld [vmem:[%s166 + $0x1a4] sm:$0xf]
      %v281 = vld [vmem:[%s166 + $0x1a8] sm:$0xf]
      %v282 = vld [vmem:[%s166 + $0x1ac] sm:$0xf]
      %v283 = vld [vmem:[%s166 + $0x1b0] sm:$0xf]
      %v284 = vld [vmem:[%s166 + $0x1b4] sm:$0xf]
      %v285 = vld [vmem:[%s166 + $0x1b8] sm:$0xf]
      %v286 = vld [vmem:[%s166 + $0x1bc] sm:$0xf]
      %v287 = vld [vmem:[%s166 + $0x1c0] sm:$0xf]
      %v288 = vld [vmem:[%s166 + $0x1c4] sm:$0xf]
      %v289 = vld [vmem:[%s166 + $0x1c8] sm:$0xf]
      %v290 = vld [vmem:[%s166 + $0x1cc] sm:$0xf]
      %v291 = vld [vmem:[%s166 + $0x1d0] sm:$0xf]
      %v292 = vld [vmem:[%s166 + $0x1d4] sm:$0xf]
      %v293 = vld [vmem:[%s166 + $0x1d8] sm:$0xf]
      %v294 = vld [vmem:[%s166 + $0x1dc] sm:$0xf]
      %v295 = vld [vmem:[%s166 + $0x1e0] sm:$0xf]
      %v296 = vld [vmem:[%s166 + $0x1e4] sm:$0xf]
      %v297 = vld [vmem:[%s166 + $0x1e8] sm:$0xf]
      %v298 = vld [vmem:[%s166 + $0x1ec] sm:$0xf]
      %v299 = vld [vmem:[%s166 + $0x1f0] sm:$0xf]
      %v300 = vld [vmem:[%s166 + $0x1f4] sm:$0xf]
      %v301 = vld [vmem:[%s166 + $0x1f8] sm:$0xf]
      %v302 = vld [vmem:[%s166 + $0x1fc] sm:$0xf]
      %v303 = vld [vmem:[%s1] sm:$0xf]
      %v304 = vld [vmem:[%s1 + $0x4] sm:$0xf]
      %v305 = vld [vmem:[%s1 + $0x8] sm:$0xf]
      %v306 = vld [vmem:[%s1 + $0xc] sm:$0xf]
      %v307 = vld [vmem:[%s1 + $0x10] sm:$0xf]
      %v308 = vld [vmem:[%s1 + $0x14] sm:$0xf]
      %v309 = vld [vmem:[%s1 + $0x18] sm:$0xf]
      %v310 = vld [vmem:[%s1 + $0x1c] sm:$0xf]
      %v311 = vld [vmem:[%s1 + $0x20] sm:$0xf]
      %v312 = vld [vmem:[%s1 + $0x24] sm:$0xf]
      %v313 = vld [vmem:[%s1 + $0x28] sm:$0x1]
      %v314 = vld [vmem:[%s2] sm:$0x1]
      %v316 = vlaneseq
      %v317 = vshrl.u32 %v316, 7
      %v318 = vsub.s32 0, %v317
      %v319 = vrot.slane %v314, %v318
      %v449 = vunpack.c.l.b16 %v175
      %v450 = vunpack.c.l.b16 %v176
      %v451 = vunpack.c.l.b16 %v177
      %v452 = vunpack.c.l.b16 %v178
      %v453 = vunpack.c.l.b16 %v179
      %v454 = vunpack.c.l.b16 %v180
      %v455 = vunpack.c.l.b16 %v181
      %v456 = vunpack.c.l.b16 %v182
      %v457 = vunpack.c.l.b16 %v183
      %v458 = vunpack.c.l.b16 %v184
      %v459 = vunpack.c.l.b16 %v185
      %v460 = vunpack.c.l.b16 %v186
      %v461 = vunpack.c.l.b16 %v187
      %v462 = vunpack.c.l.b16 %v188
      %v463 = vunpack.c.l.b16 %v189
      %v464 = vunpack.c.l.b16 %v190
      %v465 = vunpack.c.l.b16 %v191
      %v466 = vunpack.c.l.b16 %v192
      %v467 = vunpack.c.l.b16 %v193
      %v468 = vunpack.c.l.b16 %v194
      %v469 = vunpack.c.l.b16 %v195
      %v470 = vunpack.c.l.b16 %v196
      %v471 = vunpack.c.l.b16 %v197
      %v472 = vunpack.c.l.b16 %v198
      %v473 = vunpack.c.l.b16 %v199
      %v474 = vunpack.c.l.b16 %v200
      %v475 = vunpack.c.l.b16 %v201
      %v476 = vunpack.c.l.b16 %v202
      %v477 = vunpack.c.l.b16 %v203
      %v478 = vunpack.c.l.b16 %v204
      %v479 = vunpack.c.l.b16 %v205
      %v480 = vunpack.c.l.b16 %v206
      %v481 = vunpack.c.l.b16 %v207
      %v482 = vunpack.c.l.b16 %v208
      %v483 = vunpack.c.l.b16 %v209
      %v484 = vunpack.c.l.b16 %v210
      %v485 = vunpack.c.l.b16 %v211
      %v486 = vunpack.c.l.b16 %v212
      %v487 = vunpack.c.l.b16 %v213
      %v488 = vunpack.c.l.b16 %v214
      %v489 = vunpack.c.l.b16 %v215
      %v490 = vunpack.c.l.b16 %v216
      %v491 = vunpack.c.l.b16 %v217
      %v492 = vunpack.c.l.b16 %v218
      %v493 = vunpack.c.l.b16 %v219
      %v494 = vunpack.c.l.b16 %v220
      %v495 = vunpack.c.l.b16 %v221
      %v496 = vunpack.c.l.b16 %v222
      %v497 = vunpack.c.l.b16 %v223
      %v498 = vunpack.c.l.b16 %v224
      %v499 = vunpack.c.l.b16 %v225
      %v500 = vunpack.c.l.b16 %v226
      %v501 = vunpack.c.l.b16 %v227
      %v502 = vunpack.c.l.b16 %v228
      %v503 = vunpack.c.l.b16 %v229
      %v504 = vunpack.c.l.b16 %v230
      %v505 = vunpack.c.l.b16 %v231
      %v506 = vunpack.c.l.b16 %v232
      %v507 = vunpack.c.l.b16 %v233
      %v508 = vunpack.c.l.b16 %v234
      %v509 = vunpack.c.l.b16 %v235
      %v510 = vunpack.c.l.b16 %v236
      %v511 = vunpack.c.l.b16 %v237
      %v512 = vunpack.c.l.b16 %v238
      %v513 = vunpack.c.l.b16 %v239
      %v514 = vunpack.c.l.b16 %v240
      %v515 = vunpack.c.l.b16 %v241
      %v516 = vunpack.c.l.b16 %v242
      %v517 = vunpack.c.l.b16 %v243
      %v518 = vunpack.c.l.b16 %v244
      %v519 = vunpack.c.l.b16 %v245
      %v520 = vunpack.c.l.b16 %v246
      %v521 = vunpack.c.l.b16 %v247
      %v522 = vunpack.c.l.b16 %v248
      %v523 = vunpack.c.l.b16 %v249
      %v524 = vunpack.c.l.b16 %v250
      %v525 = vunpack.c.l.b16 %v251
      %v526 = vunpack.c.l.b16 %v252
      %v527 = vunpack.c.l.b16 %v253
      %v528 = vunpack.c.l.b16 %v254
      %v529 = vunpack.c.l.b16 %v255
      %v530 = vunpack.c.l.b16 %v256
      %v531 = vunpack.c.l.b16 %v257
      %v532 = vunpack.c.l.b16 %v258
      %v533 = vunpack.c.l.b16 %v259
      %v534 = vunpack.c.l.b16 %v260
      %v535 = vunpack.c.l.b16 %v261
      %v536 = vunpack.c.l.b16 %v262
      %v537 = vunpack.c.l.b16 %v263
      %v538 = vunpack.c.l.b16 %v264
      %v539 = vunpack.c.l.b16 %v265
      %v540 = vunpack.c.l.b16 %v266
      %v541 = vunpack.c.l.b16 %v267
      %v542 = vunpack.c.l.b16 %v268
      %v543 = vunpack.c.l.b16 %v269
      %v544 = vunpack.c.l.b16 %v270
      %v545 = vunpack.c.l.b16 %v271
      %v546 = vunpack.c.l.b16 %v272
      %v547 = vunpack.c.l.b16 %v273
      %v548 = vunpack.c.l.b16 %v274
      %v549 = vunpack.c.l.b16 %v275
      %v550 = vunpack.c.l.b16 %v276
      %v551 = vunpack.c.l.b16 %v277
      %v552 = vunpack.c.l.b16 %v278
      %v553 = vunpack.c.l.b16 %v279
      %v554 = vunpack.c.l.b16 %v280
      %v555 = vunpack.c.l.b16 %v281
      %v556 = vunpack.c.l.b16 %v282
      %v557 = vunpack.c.l.b16 %v283
      %v558 = vunpack.c.l.b16 %v284
      %v559 = vunpack.c.l.b16 %v285
      %v560 = vunpack.c.l.b16 %v286
      %v561 = vunpack.c.l.b16 %v287
      %v562 = vunpack.c.l.b16 %v288
      %v563 = vunpack.c.l.b16 %v289
      %v564 = vunpack.c.l.b16 %v290
      %v565 = vunpack.c.l.b16 %v291
      %v566 = vunpack.c.l.b16 %v292
      %v567 = vunpack.c.l.b16 %v293
      %v568 = vunpack.c.l.b16 %v294
      %v569 = vunpack.c.l.b16 %v295
      %v570 = vunpack.c.l.b16 %v296
      %v571 = vunpack.c.l.b16 %v297
      %v572 = vunpack.c.l.b16 %v298
      %v573 = vunpack.c.l.b16 %v299
      %v574 = vunpack.c.l.b16 %v300
      %v575 = vunpack.c.l.b16 %v301
      %v576 = vunpack.c.l.b16 %v302
      %v577 = vpack.c.b16 %v450, %v449
      %v578 = vpack.c.b16 %v452, %v451
      %v579 = vpack.c.b16 %v454, %v453
      %v580 = vpack.c.b16 %v456, %v455
      %v581 = vpack.c.b16 %v458, %v457
      %v582 = vpack.c.b16 %v460, %v459
      %v583 = vpack.c.b16 %v462, %v461
      %v584 = vpack.c.b16 %v464, %v463
      %v585 = vpack.c.b16 %v466, %v465
      %v586 = vpack.c.b16 %v468, %v467
      %v587 = vpack.c.b16 %v470, %v469
      %v588 = vpack.c.b16 %v472, %v471
      %v589 = vpack.c.b16 %v474, %v473
      %v590 = vpack.c.b16 %v476, %v475
      %v591 = vpack.c.b16 %v478, %v477
      %v592 = vpack.c.b16 %v480, %v479
      %v593 = vpack.c.b16 %v482, %v481
      %v594 = vpack.c.b16 %v484, %v483
      %v595 = vpack.c.b16 %v486, %v485
      %v596 = vpack.c.b16 %v488, %v487
      %v597 = vpack.c.b16 %v490, %v489
      %v598 = vpack.c.b16 %v492, %v491
      %v599 = vpack.c.b16 %v494, %v493
      %v600 = vpack.c.b16 %v496, %v495
      %v601 = vpack.c.b16 %v498, %v497
      %v602 = vpack.c.b16 %v500, %v499
      %v603 = vpack.c.b16 %v502, %v501
      %v604 = vpack.c.b16 %v504, %v503
      %v605 = vpack.c.b16 %v506, %v505
      %v606 = vpack.c.b16 %v508, %v507
      %v607 = vpack.c.b16 %v510, %v509
      %v608 = vpack.c.b16 %v512, %v511
      %v609 = vpack.c.b16 %v514, %v513
      %v610 = vpack.c.b16 %v516, %v515
      %v611 = vpack.c.b16 %v518, %v517
      %v612 = vpack.c.b16 %v520, %v519
      %v613 = vpack.c.b16 %v522, %v521
      %v614 = vpack.c.b16 %v524, %v523
      %v615 = vpack.c.b16 %v526, %v525
      %v616 = vpack.c.b16 %v528, %v527
      %v617 = vpack.c.b16 %v530, %v529
      %v618 = vpack.c.b16 %v532, %v531
      %v619 = vpack.c.b16 %v534, %v533
      %v620 = vpack.c.b16 %v536, %v535
      %v621 = vpack.c.b16 %v538, %v537
      %v622 = vpack.c.b16 %v540, %v539
      %v623 = vpack.c.b16 %v542, %v541
      %v624 = vpack.c.b16 %v544, %v543
      %v625 = vpack.c.b16 %v546, %v545
      %v626 = vpack.c.b16 %v548, %v547
      %v627 = vpack.c.b16 %v550, %v549
      %v628 = vpack.c.b16 %v552, %v551
      %v629 = vpack.c.b16 %v554, %v553
      %v630 = vpack.c.b16 %v556, %v555
      %v631 = vpack.c.b16 %v558, %v557
      %v632 = vpack.c.b16 %v560, %v559
      %v633 = vpack.c.b16 %v562, %v561
      %v634 = vpack.c.b16 %v564, %v563
      %v635 = vpack.c.b16 %v566, %v565
      %v636 = vpack.c.b16 %v568, %v567
      %v637 = vpack.c.b16 %v570, %v569
      %v638 = vpack.c.b16 %v572, %v571
      %v639 = vpack.c.b16 %v574, %v573
      %v640 = vpack.c.b16 %v576, %v575
      %v652 = vunpack.c.l.b16 %v303
      %v653 = vunpack.c.l.b16 %v304
      %v654 = vunpack.c.l.b16 %v305
      %v655 = vunpack.c.l.b16 %v306
      %v656 = vunpack.c.l.b16 %v307
      %v657 = vunpack.c.l.b16 %v308
      %v658 = vunpack.c.l.b16 %v309
      %v659 = vunpack.c.l.b16 %v310
      %v660 = vunpack.c.l.b16 %v311
      %v661 = vunpack.c.l.b16 %v312
      %v662 = vunpack.c.l.b16 %v313
      %v663 = vpack.c.b16 %v653, %v652
      %v664 = vpack.c.b16 %v655, %v654
      %v665 = vpack.c.b16 %v657, %v656
      %v666 = vpack.c.b16 %v659, %v658
      %v667 = vpack.c.b16 %v661, %v660
      %v668 = vpack.c.b16 %v662, %v662
      %vm674 = vcmask 662528
      %v676 = vsel %vm674, %v577, 0
      %v679 = vsel %vm674, %v578, 0
      %v682 = vsel %vm674, %v579, 0
      %v685 = vsel %vm674, %v580, 0
      %v688 = vsel %vm674, %v581, 0
      %v691 = vsel %vm674, %v582, 0
      %v694 = vsel %vm674, %v583, 0
      %v697 = vsel %vm674, %v584, 0
      %v700 = vsel %vm674, %v585, 0
      %v703 = vsel %vm674, %v586, 0
      %v706 = vsel %vm674, %v587, 0
      %v709 = vsel %vm674, %v588, 0
      %v712 = vsel %vm674, %v589, 0
      %v715 = vsel %vm674, %v590, 0
      %v718 = vsel %vm674, %v591, 0
      %v721 = vsel %vm674, %v592, 0
      %v724 = vsel %vm674, %v593, 0
      %v727 = vsel %vm674, %v594, 0
      %v730 = vsel %vm674, %v595, 0
      %v733 = vsel %vm674, %v596, 0
      %v736 = vsel %vm674, %v597, 0
      %v739 = vsel %vm674, %v598, 0
      %v742 = vsel %vm674, %v599, 0
      %v745 = vsel %vm674, %v600, 0
      %v748 = vsel %vm674, %v601, 0
      %v751 = vsel %vm674, %v602, 0
      %v754 = vsel %vm674, %v603, 0
      %v757 = vsel %vm674, %v604, 0
      %v760 = vsel %vm674, %v605, 0
      %v763 = vsel %vm674, %v606, 0
      %v766 = vsel %vm674, %v607, 0
      %v769 = vsel %vm674, %v608, 0
      %v772 = vsel %vm674, %v609, 0
      %v775 = vsel %vm674, %v610, 0
      %v778 = vsel %vm674, %v611, 0
      %v781 = vsel %vm674, %v612, 0
      %v784 = vsel %vm674, %v613, 0
      %v787 = vsel %vm674, %v614, 0
      %v790 = vsel %vm674, %v615, 0
      %v793 = vsel %vm674, %v616, 0
      %v796 = vsel %vm674, %v617, 0
      %v799 = vsel %vm674, %v618, 0
      %v802 = vsel %vm674, %v619, 0
      %v805 = vsel %vm674, %v620, 0
      %v808 = vsel %vm674, %v621, 0
      %v811 = vsel %vm674, %v622, 0
      %v814 = vsel %vm674, %v623, 0
      %v817 = vsel %vm674, %v624, 0
      %v820 = vsel %vm674, %v625, 0
      %v823 = vsel %vm674, %v626, 0
      %v826 = vsel %vm674, %v627, 0
      %v829 = vsel %vm674, %v628, 0
      %v832 = vsel %vm674, %v629, 0
      %v835 = vsel %vm674, %v630, 0
      %v838 = vsel %vm674, %v631, 0
      %v841 = vsel %vm674, %v632, 0
      %v844 = vsel %vm674, %v633, 0
      %v847 = vsel %vm674, %v634, 0
      %v850 = vsel %vm674, %v635, 0
      %v853 = vsel %vm674, %v636, 0
      %v856 = vsel %vm674, %v637, 0
      %v859 = vsel %vm674, %v638, 0
      %v862 = vsel %vm674, %v639, 0
      %v865 = vsel %vm674, %v640, 0
      %vm867 = vcmask 1040384
      %v868 = vsel 0, 4294967295, 65535
      %v869 = vsel %vm867, %v868, 0
      %v871 = vand.u32 %v668, %v869
      %873 = vmatprep.subr.bf16.mxu0 0
      %874 = vmatpush1.bf16.msra.mxu0 %v663
      %875 = vmatprep.subr.bf16.mxu0 0
      %876 = vmatpush1.bf16.msra.mxu0 %v664
      %877 = vmatprep.subr.bf16.mxu0 0
      %878 = vmatpush1.bf16.msra.mxu0 %v665
      %879 = vmatprep.subr.bf16.mxu0 0
      %880 = vmatpush1.bf16.msra.mxu0 %v666
      %881 = vmatprep.subr.bf16.mxu0 0
      %882 = vmatpush1.bf16.msra.mxu0 %v667
      %883 = vmatprep.subr.bf16.mxu0 0
      %884 = vmatpush1.bf16.msra.mxu0 %v871
      %885 = vmatprep.subr.bf16.mxu0 0
      %886 = vmatpush1.bf16.msra.mxu0 0
      %887 = vmatprep.subr.bf16.mxu0 0
      %888 = vmatpush1.bf16.msra.mxu0 0
      %889 = vmatprep.subr.bf16.mxu0 0
      %890 = vmatpush1.bf16.msra.mxu0 0
      %891 = vmatprep.subr.bf16.mxu0 0
      %892 = vmatpush1.bf16.msra.mxu0 0
      %893 = vmatprep.subr.bf16.mxu0 0
      %894 = vmatpush1.bf16.msra.mxu0 0
      %895 = vmatprep.subr.bf16.mxu0 0
      %896 = vmatpush1.bf16.msra.mxu0 0
      %897 = vmatprep.subr.bf16.mxu0 0
      %898 = vmatpush1.bf16.msra.mxu0 0
      %899 = vmatprep.subr.bf16.mxu0 0
      %900 = vmatpush1.bf16.msra.mxu0 0
      %901 = vmatprep.subr.bf16.mxu0 0
      %902 = vmatpush1.bf16.msra.mxu0 0
      %903 = vmatprep.subr.bf16.mxu0 0
      %904 = vmatpush1.bf16.msra.mxu0 0
      %905 = vmatprep.mubr.bf16.mxu0 0
      %906 = vmatmul.mubr.bf16.gmra.mrb[0].mxu0 %v676
      %v907 = vpop.f32.mrb[0].mxu0
      %v908 = vadd.f32 %v319, %v907
      %v909 = vpop.f32.mrb[0].mxu0
      %v910 = vpop.f32.mrb[0].mxu0
      %v911 = vadd.f32 %v319, %v910
      %v912 = vpop.f32.mrb[0].mxu0
      %913 = vmatprep.mubr.bf16.mxu0 0
      %914 = vmatmul.mubr.bf16.gmra.mrb[0].mxu0 %v679
      %v915 = vpop.f32.mrb[0].mxu0
      %v916 = vadd.f32 %v319, %v915
      %v917 = vpop.f32.mrb[0].mxu0
      %v918 = vpop.f32.mrb[0].mxu0
      %v919 = vadd.f32 %v319, %v918
      %v920 = vpop.f32.mrb[0].mxu0
      %921 = vmatprep.mubr.bf16.mxu0 0
      %922 = vmatmul.mubr.bf16.gmra.mrb[0].mxu0 %v682
      %v923 = vpop.f32.mrb[0].mxu0
      %v924 = vadd.f32 %v319, %v923
      %v925 = vpop.f32.mrb[0].mxu0
      %v926 = vpop.f32.mrb[0].mxu0
      %v927 = vadd.f32 %v319, %v926
      %v928 = vpop.f32.mrb[0].mxu0
      %929 = vmatprep.mubr.bf16.mxu0 0
      %930 = vmatmul.mubr.bf16.gmra.mrb[0].mxu0 %v685
      %v931 = vpop.f32.mrb[0].mxu0
      %v932 = vadd.f32 %v319, %v931
      %v933 = vpop.f32.mrb[0].mxu0
      %v934 = vpop.f32.mrb[0].mxu0
      %v935 = vadd.f32 %v319, %v934
      %v936 = vpop.f32.mrb[0].mxu0
      %937 = vmatprep.mubr.bf16.mxu0 0
      %938 = vmatmul.mubr.bf16.gmra.mrb[0].mxu0 %v688
      %v939 = vpop.f32.mrb[0].mxu0
      %v940 = vadd.f32 %v319, %v939
      %v941 = vpop.f32.mrb[0].mxu0
      %v942 = vpop.f32.mrb[0].mxu0
      %v943 = vadd.f32 %v319, %v942
      %v944 = vpop.f32.mrb[0].mxu0
      %945 = vmatprep.mubr.bf16.mxu0 0
      %946 = vmatmul.mubr.bf16.gmra.mrb[0].mxu0 %v691
      %v947 = vpop.f32.mrb[0].mxu0
      %v948 = vadd.f32 %v319, %v947
      %v949 = vpop.f32.mrb[0].mxu0
      %v950 = vpop.f32.mrb[0].mxu0
      %v951 = vadd.f32 %v319, %v950
      %v952 = vpop.f32.mrb[0].mxu0
      %953 = vmatprep.mubr.bf16.mxu0 0
      %954 = vmatmul.mubr.bf16.gmra.mrb[0].mxu0 %v694
      %v955 = vpop.f32.mrb[0].mxu0
      %v956 = vadd.f32 %v319, %v955
      %v957 = vpop.f32.mrb[0].mxu0
      %v958 = vpop.f32.mrb[0].mxu0
      %v959 = vadd.f32 %v319, %v958
      %v960 = vpop.f32.mrb[0].mxu0
      %961 = vmatprep.mubr.bf16.mxu0 0
      %962 = vmatmul.mubr.bf16.gmra.mrb[0].mxu0 %v697
      %v963 = vpop.f32.mrb[0].mxu0
      %v964 = vadd.f32 %v319, %v963
      %v965 = vpop.f32.mrb[0].mxu0
      %v966 = vpop.f32.mrb[0].mxu0
      %v967 = vadd.f32 %v319, %v966
      %v968 = vpop.f32.mrb[0].mxu0
      %969 = vmatprep.mubr.bf16.mxu0 0
      %970 = vmatmul.mubr.bf16.gmra.mrb[0].mxu0 %v700
      %v971 = vpop.f32.mrb[0].mxu0
      %v972 = vadd.f32 %v319, %v971
      %v973 = vpop.f32.mrb[0].mxu0
      %v974 = vpop.f32.mrb[0].mxu0
      %v975 = vadd.f32 %v319, %v974
      %v976 = vpop.f32.mrb[0].mxu0
      %977 = vmatprep.mubr.bf16.mxu0 0
      %978 = vmatmul.mubr.bf16.gmra.mrb[0].mxu0 %v703
      %v979 = vpop.f32.mrb[0].mxu0
      %v980 = vadd.f32 %v319, %v979
      %v981 = vpop.f32.mrb[0].mxu0
      %v982 = vpop.f32.mrb[0].mxu0
      %v983 = vadd.f32 %v319, %v982
      %v984 = vpop.f32.mrb[0].mxu0
      %985 = vmatprep.mubr.bf16.mxu0 0
      %986 = vmatmul.mubr.bf16.gmra.mrb[0].mxu0 %v706
      %v987 = vpop.f32.mrb[0].mxu0
      %v988 = vadd.f32 %v319, %v987
      %v989 = vpop.f32.mrb[0].mxu0
      %v990 = vpop.f32.mrb[0].mxu0
      %v991 = vadd.f32 %v319, %v990
      %v992 = vpop.f32.mrb[0].mxu0
      %993 = vmatprep.mubr.bf16.mxu0 0
      %994 = vmatmul.mubr.bf16.gmra.mrb[0].mxu0 %v709
      %v995 = vpop.f32.mrb[0].mxu0
      %v996 = vadd.f32 %v319, %v995
      %v997 = vpop.f32.mrb[0].mxu0
      %v998 = vpop.f32.mrb[0].mxu0
      %v999 = vadd.f32 %v319, %v998
      %v1000 = vpop.f32.mrb[0].mxu0
      %1001 = vmatprep.mubr.bf16.mxu0 0
      %1002 = vmatmul.mubr.bf16.gmra.mrb[0].mxu0 %v712
      %v1003 = vpop.f32.mrb[0].mxu0
      %v1004 = vadd.f32 %v319, %v1003
      %v1005 = vpop.f32.mrb[0].mxu0
      %v1006 = vpop.f32.mrb[0].mxu0
      %v1007 = vadd.f32 %v319, %v1006
      %v1008 = vpop.f32.mrb[0].mxu0
      %1009 = vmatprep.mubr.bf16.mxu0 0
      %1010 = vmatmul.mubr.bf16.gmra.mrb[0].mxu0 %v715
      %v1011 = vpop.f32.mrb[0].mxu0
      %v1012 = vadd.f32 %v319, %v1011
      %v1013 = vpop.f32.mrb[0].mxu0
      %v1014 = vpop.f32.mrb[0].mxu0
      %v1015 = vadd.f32 %v319, %v1014
      %v1016 = vpop.f32.mrb[0].mxu0
      %1017 = vmatprep.mubr.bf16.mxu0 0
      %1018 = vmatmul.mubr.bf16.gmra.mrb[0].mxu0 %v718
      %v1019 = vpop.f32.mrb[0].mxu0
      %v1020 = vadd.f32 %v319, %v1019
      %v1021 = vpop.f32.mrb[0].mxu0
      %v1022 = vpop.f32.mrb[0].mxu0
      %v1023 = vadd.f32 %v319, %v1022
      %v1024 = vpop.f32.mrb[0].mxu0
      %1025 = vmatprep.mubr.bf16.mxu0 0
      %1026 = vmatmul.mubr.bf16.gmra.mrb[0].mxu0 %v721
      %v1027 = vpop.f32.mrb[0].mxu0
      %v1028 = vadd.f32 %v319, %v1027
      %v1029 = vpop.f32.mrb[0].mxu0
      %v1030 = vpop.f32.mrb[0].mxu0
      %v1031 = vadd.f32 %v319, %v1030
      %v1032 = vpop.f32.mrb[0].mxu0
      %1033 = vmatprep.mubr.bf16.mxu0 0
      %1034 = vmatmul.mubr.bf16.gmra.mrb[0].mxu0 %v724
      %v1035 = vpop.f32.mrb[0].mxu0
      %v1036 = vadd.f32 %v319, %v1035
      %v1037 = vpop.f32.mrb[0].mxu0
      %v1038 = vpop.f32.mrb[0].mxu0
      %v1039 = vadd.f32 %v319, %v1038
      %v1040 = vpop.f32.mrb[0].mxu0
      %1041 = vmatprep.mubr.bf16.mxu0 0
      %1042 = vmatmul.mubr.bf16.gmra.mrb[0].mxu0 %v727
      %v1043 = vpop.f32.mrb[0].mxu0
      %v1044 = vadd.f32 %v319, %v1043
      %v1045 = vpop.f32.mrb[0].mxu0
      %v1046 = vpop.f32.mrb[0].mxu0
      %v1047 = vadd.f32 %v319, %v1046
      %v1048 = vpop.f32.mrb[0].mxu0
      %1049 = vmatprep.mubr.bf16.mxu0 0
      %1050 = vmatmul.mubr.bf16.gmra.mrb[0].mxu0 %v730
      %v1051 = vpop.f32.mrb[0].mxu0
      %v1052 = vadd.f32 %v319, %v1051
      %v1053 = vpop.f32.mrb[0].mxu0
      %v1054 = vpop.f32.mrb[0].mxu0
      %v1055 = vadd.f32 %v319, %v1054
      %v1056 = vpop.f32.mrb[0].mxu0
      %1057 = vmatprep.mubr.bf16.mxu0 0
      %1058 = vmatmul.mubr.bf16.gmra.mrb[0].mxu0 %v733
      %v1059 = vpop.f32.mrb[0].mxu0
      %v1060 = vadd.f32 %v319, %v1059
      %v1061 = vpop.f32.mrb[0].mxu0
      %v1062 = vpop.f32.mrb[0].mxu0
      %v1063 = vadd.f32 %v319, %v1062
      %v1064 = vpop.f32.mrb[0].mxu0
      %1065 = vmatprep.mubr.bf16.mxu0 0
      %1066 = vmatmul.mubr.bf16.gmra.mrb[0].mxu0 %v736
      %v1067 = vpop.f32.mrb[0].mxu0
      %v1068 = vadd.f32 %v319, %v1067
      %v1069 = vpop.f32.mrb[0].mxu0
      %v1070 = vpop.f32.mrb[0].mxu0
      %v1071 = vadd.f32 %v319, %v1070
      %v1072 = vpop.f32.mrb[0].mxu0
      %1073 = vmatprep.mubr.bf16.mxu0 0
      %1074 = vmatmul.mubr.bf16.gmra.mrb[0].mxu0 %v739
      %v1075 = vpop.f32.mrb[0].mxu0
      %v1076 = vadd.f32 %v319, %v1075
      %v1077 = vpop.f32.mrb[0].mxu0
      %v1078 = vpop.f32.mrb[0].mxu0
      %v1079 = vadd.f32 %v319, %v1078
      %v1080 = vpop.f32.mrb[0].mxu0
      %1081 = vmatprep.mubr.bf16.mxu0 0
      %1082 = vmatmul.mubr.bf16.gmra.mrb[0].mxu0 %v742
      %v1083 = vpop.f32.mrb[0].mxu0
      %v1084 = vadd.f32 %v319, %v1083
      %v1085 = vpop.f32.mrb[0].mxu0
      %v1086 = vpop.f32.mrb[0].mxu0
      %v1087 = vadd.f32 %v319, %v1086
      %v1088 = vpop.f32.mrb[0].mxu0
      %1089 = vmatprep.mubr.bf16.mxu0 0
      %1090 = vmatmul.mubr.bf16.gmra.mrb[0].mxu0 %v745
      %v1091 = vpop.f32.mrb[0].mxu0
      %v1092 = vadd.f32 %v319, %v1091
      %v1093 = vpop.f32.mrb[0].mxu0
      %v1094 = vpop.f32.mrb[0].mxu0
      %v1095 = vadd.f32 %v319, %v1094
      %v1096 = vpop.f32.mrb[0].mxu0
      %1097 = vmatprep.mubr.bf16.mxu0 0
      %1098 = vmatmul.mubr.bf16.gmra.mrb[0].mxu0 %v748
      %v1099 = vpop.f32.mrb[0].mxu0
      %v1100 = vadd.f32 %v319, %v1099
      %v1101 = vpop.f32.mrb[0].mxu0
      %v1102 = vpop.f32.mrb[0].mxu0
      %v1103 = vadd.f32 %v319, %v1102
      %v1104 = vpop.f32.mrb[0].mxu0
      %1105 = vmatprep.mubr.bf16.mxu0 0
      %1106 = vmatmul.mubr.bf16.gmra.mrb[0].mxu0 %v751
      %v1107 = vpop.f32.mrb[0].mxu0
      %v1108 = vadd.f32 %v319, %v1107
      %v1109 = vpop.f32.mrb[0].mxu0
      %v1110 = vpop.f32.mrb[0].mxu0
      %v1111 = vadd.f32 %v319, %v1110
      %v1112 = vpop.f32.mrb[0].mxu0
      %1113 = vmatprep.mubr.bf16.mxu0 0
      %1114 = vmatmul.mubr.bf16.gmra.mrb[0].mxu0 %v754
      %v1115 = vpop.f32.mrb[0].mxu0
      %v1116 = vadd.f32 %v319, %v1115
      %v1117 = vpop.f32.mrb[0].mxu0
      %v1118 = vpop.f32.mrb[0].mxu0
      %v1119 = vadd.f32 %v319, %v1118
      %v1120 = vpop.f32.mrb[0].mxu0
      %1121 = vmatprep.mubr.bf16.mxu0 0
      %1122 = vmatmul.mubr.bf16.gmra.mrb[0].mxu0 %v757
      %v1123 = vpop.f32.mrb[0].mxu0
      %v1124 = vadd.f32 %v319, %v1123
      %v1125 = vpop.f32.mrb[0].mxu0
      %v1126 = vpop.f32.mrb[0].mxu0
      %v1127 = vadd.f32 %v319, %v1126
      %v1128 = vpop.f32.mrb[0].mxu0
      %1129 = vmatprep.mubr.bf16.mxu0 0
      %1130 = vmatmul.mubr.bf16.gmra.mrb[0].mxu0 %v760
      %v1131 = vpop.f32.mrb[0].mxu0
      %v1132 = vadd.f32 %v319, %v1131
      %v1133 = vpop.f32.mrb[0].mxu0
      %v1134 = vpop.f32.mrb[0].mxu0
      %v1135 = vadd.f32 %v319, %v1134
      %v1136 = vpop.f32.mrb[0].mxu0
      %1137 = vmatprep.mubr.bf16.mxu0 0
      %1138 = vmatmul.mubr.bf16.gmra.mrb[0].mxu0 %v763
      %v1139 = vpop.f32.mrb[0].mxu0
      %v1140 = vadd.f32 %v319, %v1139
      %v1141 = vpop.f32.mrb[0].mxu0
      %v1142 = vpop.f32.mrb[0].mxu0
      %v1143 = vadd.f32 %v319, %v1142
      %v1144 = vpop.f32.mrb[0].mxu0
      %1145 = vmatprep.mubr.bf16.mxu0 0
      %1146 = vmatmul.mubr.bf16.gmra.mrb[0].mxu0 %v766
      %v1147 = vpop.f32.mrb[0].mxu0
      %v1148 = vadd.f32 %v319, %v1147
      %v1149 = vpop.f32.mrb[0].mxu0
      %v1150 = vpop.f32.mrb[0].mxu0
      %v1151 = vadd.f32 %v319, %v1150
      %v1152 = vpop.f32.mrb[0].mxu0
      %1153 = vmatprep.mubr.bf16.mxu0 0
      %1154 = vmatmul.mubr.bf16.gmra.mrb[0].mxu0 %v769
      %v1155 = vpop.f32.mrb[0].mxu0
      %v1156 = vadd.f32 %v319, %v1155
      %v1157 = vpop.f32.mrb[0].mxu0
      %v1158 = vpop.f32.mrb[0].mxu0
      %v1159 = vadd.f32 %v319, %v1158
      %v1160 = vpop.f32.mrb[0].mxu0
      %1161 = vmatprep.mubr.bf16.mxu0 0
      %1162 = vmatmul.mubr.bf16.gmra.mrb[0].mxu0 %v772
      %v1163 = vpop.f32.mrb[0].mxu0
      %v1164 = vadd.f32 %v319, %v1163
      %v1165 = vpop.f32.mrb[0].mxu0
      %v1166 = vpop.f32.mrb[0].mxu0
      %v1167 = vadd.f32 %v319, %v1166
      %v1168 = vpop.f32.mrb[0].mxu0
      %1169 = vmatprep.mubr.bf16.mxu0 0
      %1170 = vmatmul.mubr.bf16.gmra.mrb[0].mxu0 %v775
      %v1171 = vpop.f32.mrb[0].mxu0
      %v1172 = vadd.f32 %v319, %v1171
      %v1173 = vpop.f32.mrb[0].mxu0
      %v1174 = vpop.f32.mrb[0].mxu0
      %v1175 = vadd.f32 %v319, %v1174
      %v1176 = vpop.f32.mrb[0].mxu0
      %1177 = vmatprep.mubr.bf16.mxu0 0
      %1178 = vmatmul.mubr.bf16.gmra.mrb[0].mxu0 %v778
      %v1179 = vpop.f32.mrb[0].mxu0
      %v1180 = vadd.f32 %v319, %v1179
      %v1181 = vpop.f32.mrb[0].mxu0
      %v1182 = vpop.f32.mrb[0].mxu0
      %v1183 = vadd.f32 %v319, %v1182
      %v1184 = vpop.f32.mrb[0].mxu0
      %1185 = vmatprep.mubr.bf16.mxu0 0
      %1186 = vmatmul.mubr.bf16.gmra.mrb[0].mxu0 %v781
      %v1187 = vpop.f32.mrb[0].mxu0
      %v1188 = vadd.f32 %v319, %v1187
      %v1189 = vpop.f32.mrb[0].mxu0
      %v1190 = vpop.f32.mrb[0].mxu0
      %v1191 = vadd.f32 %v319, %v1190
      %v1192 = vpop.f32.mrb[0].mxu0
      %1193 = vmatprep.mubr.bf16.mxu0 0
      %1194 = vmatmul.mubr.bf16.gmra.mrb[0].mxu0 %v784
      %v1195 = vpop.f32.mrb[0].mxu0
      %v1196 = vadd.f32 %v319, %v1195
      %v1197 = vpop.f32.mrb[0].mxu0
      %v1198 = vpop.f32.mrb[0].mxu0
      %v1199 = vadd.f32 %v319, %v1198
      %v1200 = vpop.f32.mrb[0].mxu0
      %1201 = vmatprep.mubr.bf16.mxu0 0
      %1202 = vmatmul.mubr.bf16.gmra.mrb[0].mxu0 %v787
      %v1203 = vpop.f32.mrb[0].mxu0
      %v1204 = vadd.f32 %v319, %v1203
      %v1205 = vpop.f32.mrb[0].mxu0
      %v1206 = vpop.f32.mrb[0].mxu0
      %v1207 = vadd.f32 %v319, %v1206
      %v1208 = vpop.f32.mrb[0].mxu0
      %1209 = vmatprep.mubr.bf16.mxu0 0
      %1210 = vmatmul.mubr.bf16.gmra.mrb[0].mxu0 %v790
      %v1211 = vpop.f32.mrb[0].mxu0
      %v1212 = vadd.f32 %v319, %v1211
      %v1213 = vpop.f32.mrb[0].mxu0
      %v1214 = vpop.f32.mrb[0].mxu0
      %v1215 = vadd.f32 %v319, %v1214
      %v1216 = vpop.f32.mrb[0].mxu0
      %1217 = vmatprep.mubr.bf16.mxu0 0
      %1218 = vmatmul.mubr.bf16.gmra.mrb[0].mxu0 %v793
      %v1219 = vpop.f32.mrb[0].mxu0
      %v1220 = vadd.f32 %v319, %v1219
      %v1221 = vpop.f32.mrb[0].mxu0
      %v1222 = vpop.f32.mrb[0].mxu0
      %v1223 = vadd.f32 %v319, %v1222
      %v1224 = vpop.f32.mrb[0].mxu0
      %1225 = vmatprep.mubr.bf16.mxu0 0
      %1226 = vmatmul.mubr.bf16.gmra.mrb[0].mxu0 %v796
      %v1227 = vpop.f32.mrb[0].mxu0
      %v1228 = vadd.f32 %v319, %v1227
      %v1229 = vpop.f32.mrb[0].mxu0
      %v1230 = vpop.f32.mrb[0].mxu0
      %v1231 = vadd.f32 %v319, %v1230
      %v1232 = vpop.f32.mrb[0].mxu0
      %1233 = vmatprep.mubr.bf16.mxu0 0
      %1234 = vmatmul.mubr.bf16.gmra.mrb[0].mxu0 %v799
      %v1235 = vpop.f32.mrb[0].mxu0
      %v1236 = vadd.f32 %v319, %v1235
      %v1237 = vpop.f32.mrb[0].mxu0
      %v1238 = vpop.f32.mrb[0].mxu0
      %v1239 = vadd.f32 %v319, %v1238
      %v1240 = vpop.f32.mrb[0].mxu0
      %1241 = vmatprep.mubr.bf16.mxu0 0
      %1242 = vmatmul.mubr.bf16.gmra.mrb[0].mxu0 %v802
      %v1243 = vpop.f32.mrb[0].mxu0
      %v1244 = vadd.f32 %v319, %v1243
      %v1245 = vpop.f32.mrb[0].mxu0
      %v1246 = vpop.f32.mrb[0].mxu0
      %v1247 = vadd.f32 %v319, %v1246
      %v1248 = vpop.f32.mrb[0].mxu0
      %1249 = vmatprep.mubr.bf16.mxu0 0
      %1250 = vmatmul.mubr.bf16.gmra.mrb[0].mxu0 %v805
      %v1251 = vpop.f32.mrb[0].mxu0
      %v1252 = vadd.f32 %v319, %v1251
      %v1253 = vpop.f32.mrb[0].mxu0
      %v1254 = vpop.f32.mrb[0].mxu0
      %v1255 = vadd.f32 %v319, %v1254
      %v1256 = vpop.f32.mrb[0].mxu0
      %1257 = vmatprep.mubr.bf16.mxu0 0
      %1258 = vmatmul.mubr.bf16.gmra.mrb[0].mxu0 %v808
      %v1259 = vpop.f32.mrb[0].mxu0
      %v1260 = vadd.f32 %v319, %v1259
      %v1261 = vpop.f32.mrb[0].mxu0
      %v1262 = vpop.f32.mrb[0].mxu0
      %v1263 = vadd.f32 %v319, %v1262
      %v1264 = vpop.f32.mrb[0].mxu0
      %1265 = vmatprep.mubr.bf16.mxu0 0
      %1266 = vmatmul.mubr.bf16.gmra.mrb[0].mxu0 %v811
      %v1267 = vpop.f32.mrb[0].mxu0
      %v1268 = vadd.f32 %v319, %v1267
      %v1269 = vpop.f32.mrb[0].mxu0
      %v1270 = vpop.f32.mrb[0].mxu0
      %v1271 = vadd.f32 %v319, %v1270
      %v1272 = vpop.f32.mrb[0].mxu0
      %1273 = vmatprep.mubr.bf16.mxu0 0
      %1274 = vmatmul.mubr.bf16.gmra.mrb[0].mxu0 %v814
      %v1275 = vpop.f32.mrb[0].mxu0
      %v1276 = vadd.f32 %v319, %v1275
      %v1277 = vpop.f32.mrb[0].mxu0
      %v1278 = vpop.f32.mrb[0].mxu0
      %v1279 = vadd.f32 %v319, %v1278
      %v1280 = vpop.f32.mrb[0].mxu0
      %1281 = vmatprep.mubr.bf16.mxu0 0
      %1282 = vmatmul.mubr.bf16.gmra.mrb[0].mxu0 %v817
      %v1283 = vpop.f32.mrb[0].mxu0
      %v1284 = vadd.f32 %v319, %v1283
      %v1285 = vpop.f32.mrb[0].mxu0
      %v1286 = vpop.f32.mrb[0].mxu0
      %v1287 = vadd.f32 %v319, %v1286
      %v1288 = vpop.f32.mrb[0].mxu0
      %1289 = vmatprep.mubr.bf16.mxu0 0
      %1290 = vmatmul.mubr.bf16.gmra.mrb[0].mxu0 %v820
      %v1291 = vpop.f32.mrb[0].mxu0
      %v1292 = vadd.f32 %v319, %v1291
      %v1293 = vpop.f32.mrb[0].mxu0
      %v1294 = vpop.f32.mrb[0].mxu0
      %v1295 = vadd.f32 %v319, %v1294
      %v1296 = vpop.f32.mrb[0].mxu0
      %1297 = vmatprep.mubr.bf16.mxu0 0
      %1298 = vmatmul.mubr.bf16.gmra.mrb[0].mxu0 %v823
      %v1299 = vpop.f32.mrb[0].mxu0
      %v1300 = vadd.f32 %v319, %v1299
      %v1301 = vpop.f32.mrb[0].mxu0
      %v1302 = vpop.f32.mrb[0].mxu0
      %v1303 = vadd.f32 %v319, %v1302
      %v1304 = vpop.f32.mrb[0].mxu0
      %1305 = vmatprep.mubr.bf16.mxu0 0
      %1306 = vmatmul.mubr.bf16.gmra.mrb[0].mxu0 %v826
      %v1307 = vpop.f32.mrb[0].mxu0
      %v1308 = vadd.f32 %v319, %v1307
      %v1309 = vpop.f32.mrb[0].mxu0
      %v1310 = vpop.f32.mrb[0].mxu0
      %v1311 = vadd.f32 %v319, %v1310
      %v1312 = vpop.f32.mrb[0].mxu0
      %1313 = vmatprep.mubr.bf16.mxu0 0
      %1314 = vmatmul.mubr.bf16.gmra.mrb[0].mxu0 %v829
      %v1315 = vpop.f32.mrb[0].mxu0
      %v1316 = vadd.f32 %v319, %v1315
      %v1317 = vpop.f32.mrb[0].mxu0
      %v1318 = vpop.f32.mrb[0].mxu0
      %v1319 = vadd.f32 %v319, %v1318
      %v1320 = vpop.f32.mrb[0].mxu0
      %1321 = vmatprep.mubr.bf16.mxu0 0
      %1322 = vmatmul.mubr.bf16.gmra.mrb[0].mxu0 %v832
      %v1323 = vpop.f32.mrb[0].mxu0
      %v1324 = vadd.f32 %v319, %v1323
      %v1325 = vpop.f32.mrb[0].mxu0
      %v1326 = vpop.f32.mrb[0].mxu0
      %v1327 = vadd.f32 %v319, %v1326
      %v1328 = vpop.f32.mrb[0].mxu0
      %1329 = vmatprep.mubr.bf16.mxu0 0
      %1330 = vmatmul.mubr.bf16.gmra.mrb[0].mxu0 %v835
      %v1331 = vpop.f32.mrb[0].mxu0
      %v1332 = vadd.f32 %v319, %v1331
      %v1333 = vpop.f32.mrb[0].mxu0
      %v1334 = vpop.f32.mrb[0].mxu0
      %v1335 = vadd.f32 %v319, %v1334
      %v1336 = vpop.f32.mrb[0].mxu0
      %1337 = vmatprep.mubr.bf16.mxu0 0
      %1338 = vmatmul.mubr.bf16.gmra.mrb[0].mxu0 %v838
      %v1339 = vpop.f32.mrb[0].mxu0
      %v1340 = vadd.f32 %v319, %v1339
      %v1341 = vpop.f32.mrb[0].mxu0
      %v1342 = vpop.f32.mrb[0].mxu0
      %v1343 = vadd.f32 %v319, %v1342
      %v1344 = vpop.f32.mrb[0].mxu0
      %1345 = vmatprep.mubr.bf16.mxu0 0
      %1346 = vmatmul.mubr.bf16.gmra.mrb[0].mxu0 %v841
      %v1347 = vpop.f32.mrb[0].mxu0
      %v1348 = vadd.f32 %v319, %v1347
      %v1349 = vpop.f32.mrb[0].mxu0
      %v1350 = vpop.f32.mrb[0].mxu0
      %v1351 = vadd.f32 %v319, %v1350
      %v1352 = vpop.f32.mrb[0].mxu0
      %1353 = vmatprep.mubr.bf16.mxu0 0
      %1354 = vmatmul.mubr.bf16.gmra.mrb[0].mxu0 %v844
      %v1355 = vpop.f32.mrb[0].mxu0
      %v1356 = vadd.f32 %v319, %v1355
      %v1357 = vpop.f32.mrb[0].mxu0
      %v1358 = vpop.f32.mrb[0].mxu0
      %v1359 = vadd.f32 %v319, %v1358
      %v1360 = vpop.f32.mrb[0].mxu0
      %1361 = vmatprep.mubr.bf16.mxu0 0
      %1362 = vmatmul.mubr.bf16.gmra.mrb[0].mxu0 %v847
      %v1363 = vpop.f32.mrb[0].mxu0
      %v1364 = vadd.f32 %v319, %v1363
      %v1365 = vpop.f32.mrb[0].mxu0
      %v1366 = vpop.f32.mrb[0].mxu0
      %v1367 = vadd.f32 %v319, %v1366
      %v1368 = vpop.f32.mrb[0].mxu0
      %1369 = vmatprep.mubr.bf16.mxu0 0
      %1370 = vmatmul.mubr.bf16.gmra.mrb[0].mxu0 %v850
      %v1371 = vpop.f32.mrb[0].mxu0
      %v1372 = vadd.f32 %v319, %v1371
      %v1373 = vpop.f32.mrb[0].mxu0
      %v1374 = vpop.f32.mrb[0].mxu0
      %v1375 = vadd.f32 %v319, %v1374
      %v1376 = vpop.f32.mrb[0].mxu0
      %1377 = vmatprep.mubr.bf16.mxu0 0
      %1378 = vmatmul.mubr.bf16.gmra.mrb[0].mxu0 %v853
      %v1379 = vpop.f32.mrb[0].mxu0
      %v1380 = vadd.f32 %v319, %v1379
      %v1381 = vpop.f32.mrb[0].mxu0
      %v1382 = vpop.f32.mrb[0].mxu0
      %v1383 = vadd.f32 %v319, %v1382
      %v1384 = vpop.f32.mrb[0].mxu0
      %1385 = vmatprep.mubr.bf16.mxu0 0
      %1386 = vmatmul.mubr.bf16.gmra.mrb[0].mxu0 %v856
      %v1387 = vpop.f32.mrb[0].mxu0
      %v1388 = vadd.f32 %v319, %v1387
      %v1389 = vpop.f32.mrb[0].mxu0
      %v1390 = vpop.f32.mrb[0].mxu0
      %v1391 = vadd.f32 %v319, %v1390
      %v1392 = vpop.f32.mrb[0].mxu0
      %1393 = vmatprep.mubr.bf16.mxu0 0
      %1394 = vmatmul.mubr.bf16.gmra.mrb[0].mxu0 %v859
      %v1395 = vpop.f32.mrb[0].mxu0
      %v1396 = vadd.f32 %v319, %v1395
      %v1397 = vpop.f32.mrb[0].mxu0
      %v1398 = vpop.f32.mrb[0].mxu0
      %v1399 = vadd.f32 %v319, %v1398
      %v1400 = vpop.f32.mrb[0].mxu0
      %1401 = vmatprep.mubr.bf16.mxu0 0
      %1402 = vmatmul.mubr.bf16.gmra.mrb[0].mxu0 %v862
      %v1403 = vpop.f32.mrb[0].mxu0
      %v1404 = vadd.f32 %v319, %v1403
      %v1405 = vpop.f32.mrb[0].mxu0
      %v1406 = vpop.f32.mrb[0].mxu0
      %v1407 = vadd.f32 %v319, %v1406
      %v1408 = vpop.f32.mrb[0].mxu0
      %1409 = vmatprep.mubr.bf16.mxu0 0
      %1410 = vmatmul.mubr.bf16.gmra.mrb[0].mxu0 %v865
      %v1411 = vpop.f32.mrb[0].mxu0
      %v1412 = vadd.f32 %v319, %v1411
      %v1413 = vpop.f32.mrb[0].mxu0
      %v1414 = vpop.f32.mrb[0].mxu0
      %v1415 = vadd.f32 %v319, %v1414
      %v1416 = vpop.f32.mrb[0].mxu0
      %1417 = vdwg.mxu0
      %v1418 = vmax.f32 %v908, 0.0
      %v1419 = vmax.f32 %v911, 0.0
      %v1420 = vmax.f32 %v916, 0.0
      %v1421 = vmax.f32 %v919, 0.0
      %v1422 = vmax.f32 %v924, 0.0
      %v1423 = vmax.f32 %v927, 0.0
      %v1424 = vmax.f32 %v932, 0.0
      %v1425 = vmax.f32 %v935, 0.0
      %v1426 = vmax.f32 %v940, 0.0
      %v1427 = vmax.f32 %v943, 0.0
      %v1428 = vmax.f32 %v948, 0.0
      %v1429 = vmax.f32 %v951, 0.0
      %v1430 = vmax.f32 %v956, 0.0
      %v1431 = vmax.f32 %v959, 0.0
      %v1432 = vmax.f32 %v964, 0.0
      %v1433 = vmax.f32 %v967, 0.0
      %v1434 = vmax.f32 %v972, 0.0
      %v1435 = vmax.f32 %v975, 0.0
      %v1436 = vmax.f32 %v980, 0.0
      %v1437 = vmax.f32 %v983, 0.0
      %v1438 = vmax.f32 %v988, 0.0
      %v1439 = vmax.f32 %v991, 0.0
      %v1440 = vmax.f32 %v996, 0.0
      %v1441 = vmax.f32 %v999, 0.0
      %v1442 = vmax.f32 %v1004, 0.0
      %v1443 = vmax.f32 %v1007, 0.0
      %v1444 = vmax.f32 %v1012, 0.0
      %v1445 = vmax.f32 %v1015, 0.0
      %v1446 = vmax.f32 %v1020, 0.0
      %v1447 = vmax.f32 %v1023, 0.0
      %v1448 = vmax.f32 %v1028, 0.0
      %v1449 = vmax.f32 %v1031, 0.0
      %v1450 = vmax.f32 %v1036, 0.0
      %v1451 = vmax.f32 %v1039, 0.0
      %v1452 = vmax.f32 %v1044, 0.0
      %v1453 = vmax.f32 %v1047, 0.0
      %v1454 = vmax.f32 %v1052, 0.0
      %v1455 = vmax.f32 %v1055, 0.0
      %v1456 = vmax.f32 %v1060, 0.0
      %v1457 = vmax.f32 %v1063, 0.0
      %v1458 = vmax.f32 %v1068, 0.0
      %v1459 = vmax.f32 %v1071, 0.0
      %v1460 = vmax.f32 %v1076, 0.0
      %v1461 = vmax.f32 %v1079, 0.0
      %v1462 = vmax.f32 %v1084, 0.0
      %v1463 = vmax.f32 %v1087, 0.0
      %v1464 = vmax.f32 %v1092, 0.0
      %v1465 = vmax.f32 %v1095, 0.0
      %v1466 = vmax.f32 %v1100, 0.0
      %v1467 = vmax.f32 %v1103, 0.0
      %v1468 = vmax.f32 %v1108, 0.0
      %v1469 = vmax.f32 %v1111, 0.0
      %v1470 = vmax.f32 %v1116, 0.0
      %v1471 = vmax.f32 %v1119, 0.0
      %v1472 = vmax.f32 %v1124, 0.0
      %v1473 = vmax.f32 %v1127, 0.0
      %v1474 = vmax.f32 %v1132, 0.0
      %v1475 = vmax.f32 %v1135, 0.0
      %v1476 = vmax.f32 %v1140, 0.0
      %v1477 = vmax.f32 %v1143, 0.0
      %v1478 = vmax.f32 %v1148, 0.0
      %v1479 = vmax.f32 %v1151, 0.0
      %v1480 = vmax.f32 %v1156, 0.0
      %v1481 = vmax.f32 %v1159, 0.0
      %v1482 = vmax.f32 %v1164, 0.0
      %v1483 = vmax.f32 %v1167, 0.0
      %v1484 = vmax.f32 %v1172, 0.0
      %v1485 = vmax.f32 %v1175, 0.0
      %v1486 = vmax.f32 %v1180, 0.0
      %v1487 = vmax.f32 %v1183, 0.0
      %v1488 = vmax.f32 %v1188, 0.0
      %v1489 = vmax.f32 %v1191, 0.0
      %v1490 = vmax.f32 %v1196, 0.0
      %v1491 = vmax.f32 %v1199, 0.0
      %v1492 = vmax.f32 %v1204, 0.0
      %v1493 = vmax.f32 %v1207, 0.0
      %v1494 = vmax.f32 %v1212, 0.0
      %v1495 = vmax.f32 %v1215, 0.0
      %v1496 = vmax.f32 %v1220, 0.0
      %v1497 = vmax.f32 %v1223, 0.0
      %v1498 = vmax.f32 %v1228, 0.0
      %v1499 = vmax.f32 %v1231, 0.0
      %v1500 = vmax.f32 %v1236, 0.0
      %v1501 = vmax.f32 %v1239, 0.0
      %v1502 = vmax.f32 %v1244, 0.0
      %v1503 = vmax.f32 %v1247, 0.0
      %v1504 = vmax.f32 %v1252, 0.0
      %v1505 = vmax.f32 %v1255, 0.0
      %v1506 = vmax.f32 %v1260, 0.0
      %v1507 = vmax.f32 %v1263, 0.0
      %v1508 = vmax.f32 %v1268, 0.0
      %v1509 = vmax.f32 %v1271, 0.0
      %v1510 = vmax.f32 %v1276, 0.0
      %v1511 = vmax.f32 %v1279, 0.0
      %v1512 = vmax.f32 %v1284, 0.0
      %v1513 = vmax.f32 %v1287, 0.0
      %v1514 = vmax.f32 %v1292, 0.0
      %v1515 = vmax.f32 %v1295, 0.0
      %v1516 = vmax.f32 %v1300, 0.0
      %v1517 = vmax.f32 %v1303, 0.0
      %v1518 = vmax.f32 %v1308, 0.0
      %v1519 = vmax.f32 %v1311, 0.0
      %v1520 = vmax.f32 %v1316, 0.0
      %v1521 = vmax.f32 %v1319, 0.0
      %v1522 = vmax.f32 %v1324, 0.0
      %v1523 = vmax.f32 %v1327, 0.0
      %v1524 = vmax.f32 %v1332, 0.0
      %v1525 = vmax.f32 %v1335, 0.0
      %v1526 = vmax.f32 %v1340, 0.0
      %v1527 = vmax.f32 %v1343, 0.0
      %v1528 = vmax.f32 %v1348, 0.0
      %v1529 = vmax.f32 %v1351, 0.0
      %v1530 = vmax.f32 %v1356, 0.0
      %v1531 = vmax.f32 %v1359, 0.0
      %v1532 = vmax.f32 %v1364, 0.0
      %v1533 = vmax.f32 %v1367, 0.0
      %v1534 = vmax.f32 %v1372, 0.0
      %v1535 = vmax.f32 %v1375, 0.0
      %v1536 = vmax.f32 %v1380, 0.0
      %v1537 = vmax.f32 %v1383, 0.0
      %v1538 = vmax.f32 %v1388, 0.0
      %v1539 = vmax.f32 %v1391, 0.0
      %v1540 = vmax.f32 %v1396, 0.0
      %v1541 = vmax.f32 %v1399, 0.0
      %v1542 = vmax.f32 %v1404, 0.0
      %v1543 = vmax.f32 %v1407, 0.0
      %v1544 = vmax.f32 %v1412, 0.0
      %v1545 = vmax.f32 %v1415, 0.0
      %v1546 = vmin.f32 %v1418, 6.0
      %v1547 = vmin.f32 %v1419, 6.0
      %v1548 = vmin.f32 %v1420, 6.0
      %v1549 = vmin.f32 %v1421, 6.0
      %v1550 = vmin.f32 %v1422, 6.0
      %v1551 = vmin.f32 %v1423, 6.0
      %v1552 = vmin.f32 %v1424, 6.0
      %v1553 = vmin.f32 %v1425, 6.0
      %v1554 = vmin.f32 %v1426, 6.0
      %v1555 = vmin.f32 %v1427, 6.0
      %v1556 = vmin.f32 %v1428, 6.0
      %v1557 = vmin.f32 %v1429, 6.0
      %v1558 = vmin.f32 %v1430, 6.0
      %v1559 = vmin.f32 %v1431, 6.0
      %v1560 = vmin.f32 %v1432, 6.0
      %v1561 = vmin.f32 %v1433, 6.0
      %v1562 = vmin.f32 %v1434, 6.0
      %v1563 = vmin.f32 %v1435, 6.0
      %v1564 = vmin.f32 %v1436, 6.0
      %v1565 = vmin.f32 %v1437, 6.0
      %v1566 = vmin.f32 %v1438, 6.0
      %v1567 = vmin.f32 %v1439, 6.0
      %v1568 = vmin.f32 %v1440, 6.0
      %v1569 = vmin.f32 %v1441, 6.0
      %v1570 = vmin.f32 %v1442, 6.0
      %v1571 = vmin.f32 %v1443, 6.0
      %v1572 = vmin.f32 %v1444, 6.0
      %v1573 = vmin.f32 %v1445, 6.0
      %v1574 = vmin.f32 %v1446, 6.0
      %v1575 = vmin.f32 %v1447, 6.0
      %v1576 = vmin.f32 %v1448, 6.0
      %v1577 = vmin.f32 %v1449, 6.0
      %v1578 = vmin.f32 %v1450, 6.0
      %v1579 = vmin.f32 %v1451, 6.0
      %v1580 = vmin.f32 %v1452, 6.0
      %v1581 = vmin.f32 %v1453, 6.0
      %v1582 = vmin.f32 %v1454, 6.0
      %v1583 = vmin.f32 %v1455, 6.0
      %v1584 = vmin.f32 %v1456, 6.0
      %v1585 = vmin.f32 %v1457, 6.0
      %v1586 = vmin.f32 %v1458, 6.0
      %v1587 = vmin.f32 %v1459, 6.0
      %v1588 = vmin.f32 %v1460, 6.0
      %v1589 = vmin.f32 %v1461, 6.0
      %v1590 = vmin.f32 %v1462, 6.0
      %v1591 = vmin.f32 %v1463, 6.0
      %v1592 = vmin.f32 %v1464, 6.0
      %v1593 = vmin.f32 %v1465, 6.0
      %v1594 = vmin.f32 %v1466, 6.0
      %v1595 = vmin.f32 %v1467, 6.0
      %v1596 = vmin.f32 %v1468, 6.0
      %v1597 = vmin.f32 %v1469, 6.0
      %v1598 = vmin.f32 %v1470, 6.0
      %v1599 = vmin.f32 %v1471, 6.0
      %v1600 = vmin.f32 %v1472, 6.0
      %v1601 = vmin.f32 %v1473, 6.0
      %v1602 = vmin.f32 %v1474, 6.0
      %v1603 = vmin.f32 %v1475, 6.0
      %v1604 = vmin.f32 %v1476, 6.0
      %v1605 = vmin.f32 %v1477, 6.0
      %v1606 = vmin.f32 %v1478, 6.0
      %v1607 = vmin.f32 %v1479, 6.0
      %v1608 = vmin.f32 %v1480, 6.0
      %v1609 = vmin.f32 %v1481, 6.0
      %v1610 = vmin.f32 %v1482, 6.0
      %v1611 = vmin.f32 %v1483, 6.0
      %v1612 = vmin.f32 %v1484, 6.0
      %v1613 = vmin.f32 %v1485, 6.0
      %v1614 = vmin.f32 %v1486, 6.0
      %v1615 = vmin.f32 %v1487, 6.0
      %v1616 = vmin.f32 %v1488, 6.0
      %v1617 = vmin.f32 %v1489, 6.0
      %v1618 = vmin.f32 %v1490, 6.0
      %v1619 = vmin.f32 %v1491, 6.0
      %v1620 = vmin.f32 %v1492, 6.0
      %v1621 = vmin.f32 %v1493, 6.0
      %v1622 = vmin.f32 %v1494, 6.0
      %v1623 = vmin.f32 %v1495, 6.0
      %v1624 = vmin.f32 %v1496, 6.0
      %v1625 = vmin.f32 %v1497, 6.0
      %v1626 = vmin.f32 %v1498, 6.0
      %v1627 = vmin.f32 %v1499, 6.0
      %v1628 = vmin.f32 %v1500, 6.0
      %v1629 = vmin.f32 %v1501, 6.0
      %v1630 = vmin.f32 %v1502, 6.0
      %v1631 = vmin.f32 %v1503, 6.0
      %v1632 = vmin.f32 %v1504, 6.0
      %v1633 = vmin.f32 %v1505, 6.0
      %v1634 = vmin.f32 %v1506, 6.0
      %v1635 = vmin.f32 %v1507, 6.0
      %v1636 = vmin.f32 %v1508, 6.0
      %v1637 = vmin.f32 %v1509, 6.0
      %v1638 = vmin.f32 %v1510, 6.0
      %v1639 = vmin.f32 %v1511, 6.0
      %v1640 = vmin.f32 %v1512, 6.0
      %v1641 = vmin.f32 %v1513, 6.0
      %v1642 = vmin.f32 %v1514, 6.0
      %v1643 = vmin.f32 %v1515, 6.0
      %v1644 = vmin.f32 %v1516, 6.0
      %v1645 = vmin.f32 %v1517, 6.0
      %v1646 = vmin.f32 %v1518, 6.0
      %v1647 = vmin.f32 %v1519, 6.0
      %v1648 = vmin.f32 %v1520, 6.0
      %v1649 = vmin.f32 %v1521, 6.0
      %v1650 = vmin.f32 %v1522, 6.0
      %v1651 = vmin.f32 %v1523, 6.0
      %v1652 = vmin.f32 %v1524, 6.0
      %v1653 = vmin.f32 %v1525, 6.0
      %v1654 = vmin.f32 %v1526, 6.0
      %v1655 = vmin.f32 %v1527, 6.0
      %v1656 = vmin.f32 %v1528, 6.0
      %v1657 = vmin.f32 %v1529, 6.0
      %v1658 = vmin.f32 %v1530, 6.0
      %v1659 = vmin.f32 %v1531, 6.0
      %v1660 = vmin.f32 %v1532, 6.0
      %v1661 = vmin.f32 %v1533, 6.0
      %v1662 = vmin.f32 %v1534, 6.0
      %v1663 = vmin.f32 %v1535, 6.0
      %v1664 = vmin.f32 %v1536, 6.0
      %v1665 = vmin.f32 %v1537, 6.0
      %v1666 = vmin.f32 %v1538, 6.0
      %v1667 = vmin.f32 %v1539, 6.0
      %v1668 = vmin.f32 %v1540, 6.0
      %v1669 = vmin.f32 %v1541, 6.0
      %v1670 = vmin.f32 %v1542, 6.0
      %v1671 = vmin.f32 %v1543, 6.0
      %v1672 = vmin.f32 %v1544, 6.0
      %v1673 = vmin.f32 %v1545, 6.0
      %v1674 = vpack.c.bf16 %v1547, %v1546
      %v1675 = vpack.c.bf16 %v1549, %v1548
      %v1676 = vpack.c.bf16 %v1551, %v1550
      %v1677 = vpack.c.bf16 %v1553, %v1552
      %v1678 = vpack.c.bf16 %v1555, %v1554
      %v1679 = vpack.c.bf16 %v1557, %v1556
      %v1680 = vpack.c.bf16 %v1559, %v1558
      %v1681 = vpack.c.bf16 %v1561, %v1560
      %v1682 = vpack.c.bf16 %v1563, %v1562
      %v1683 = vpack.c.bf16 %v1565, %v1564
      %v1684 = vpack.c.bf16 %v1567, %v1566
      %v1685 = vpack.c.bf16 %v1569, %v1568
      %v1686 = vpack.c.bf16 %v1571, %v1570
      %v1687 = vpack.c.bf16 %v1573, %v1572
      %v1688 = vpack.c.bf16 %v1575, %v1574
      %v1689 = vpack.c.bf16 %v1577, %v1576
      %v1690 = vpack.c.bf16 %v1579, %v1578
      %v1691 = vpack.c.bf16 %v1581, %v1580
      %v1692 = vpack.c.bf16 %v1583, %v1582
      %v1693 = vpack.c.bf16 %v1585, %v1584
      %v1694 = vpack.c.bf16 %v1587, %v1586
      %v1695 = vpack.c.bf16 %v1589, %v1588
      %v1696 = vpack.c.bf16 %v1591, %v1590
      %v1697 = vpack.c.bf16 %v1593, %v1592
      %v1698 = vpack.c.bf16 %v1595, %v1594
      %v1699 = vpack.c.bf16 %v1597, %v1596
      %v1700 = vpack.c.bf16 %v1599, %v1598
      %v1701 = vpack.c.bf16 %v1601, %v1600
      %v1702 = vpack.c.bf16 %v1603, %v1602
      %v1703 = vpack.c.bf16 %v1605, %v1604
      %v1704 = vpack.c.bf16 %v1607, %v1606
      %v1705 = vpack.c.bf16 %v1609, %v1608
      %v1706 = vpack.c.bf16 %v1611, %v1610
      %v1707 = vpack.c.bf16 %v1613, %v1612
      %v1708 = vpack.c.bf16 %v1615, %v1614
      %v1709 = vpack.c.bf16 %v1617, %v1616
      %v1710 = vpack.c.bf16 %v1619, %v1618
      %v1711 = vpack.c.bf16 %v1621, %v1620
      %v1712 = vpack.c.bf16 %v1623, %v1622
      %v1713 = vpack.c.bf16 %v1625, %v1624
      %v1714 = vpack.c.bf16 %v1627, %v1626
      %v1715 = vpack.c.bf16 %v1629, %v1628
      %v1716 = vpack.c.bf16 %v1631, %v1630
      %v1717 = vpack.c.bf16 %v1633, %v1632
      %v1718 = vpack.c.bf16 %v1635, %v1634
      %v1719 = vpack.c.bf16 %v1637, %v1636
      %v1720 = vpack.c.bf16 %v1639, %v1638
      %v1721 = vpack.c.bf16 %v1641, %v1640
      %v1722 = vpack.c.bf16 %v1643, %v1642
      %v1723 = vpack.c.bf16 %v1645, %v1644
      %v1724 = vpack.c.bf16 %v1647, %v1646
      %v1725 = vpack.c.bf16 %v1649, %v1648
      %v1726 = vpack.c.bf16 %v1651, %v1650
      %v1727 = vpack.c.bf16 %v1653, %v1652
      %v1728 = vpack.c.bf16 %v1655, %v1654
      %v1729 = vpack.c.bf16 %v1657, %v1656
      %v1730 = vpack.c.bf16 %v1659, %v1658
      %v1731 = vpack.c.bf16 %v1661, %v1660
      %v1732 = vpack.c.bf16 %v1663, %v1662
      %v1733 = vpack.c.bf16 %v1665, %v1664
      %v1734 = vpack.c.bf16 %v1667, %v1666
      %v1735 = vpack.c.bf16 %v1669, %v1668
      %v1736 = vpack.c.bf16 %v1671, %v1670
      %v1737 = vpack.c.bf16 %v1673, %v1672
      %v1802 = vunpack.c.l.b16 %v1674
      %v1803 = vunpack.c.h.b16 %v1674
      %v1804 = vunpack.c.l.b16 %v1675
      %v1805 = vunpack.c.h.b16 %v1675
      %v1806 = vunpack.c.l.b16 %v1676
      %v1807 = vunpack.c.h.b16 %v1676
      %v1808 = vunpack.c.l.b16 %v1677
      %v1809 = vunpack.c.h.b16 %v1677
      %v1810 = vunpack.c.l.b16 %v1678
      %v1811 = vunpack.c.h.b16 %v1678
      %v1812 = vunpack.c.l.b16 %v1679
      %v1813 = vunpack.c.h.b16 %v1679
      %v1814 = vunpack.c.l.b16 %v1680
      %v1815 = vunpack.c.h.b16 %v1680
      %v1816 = vunpack.c.l.b16 %v1681
      %v1817 = vunpack.c.h.b16 %v1681
      %v1818 = vunpack.c.l.b16 %v1682
      %v1819 = vunpack.c.h.b16 %v1682
      %v1820 = vunpack.c.l.b16 %v1683
      %v1821 = vunpack.c.h.b16 %v1683
      %v1822 = vunpack.c.l.b16 %v1684
      %v1823 = vunpack.c.h.b16 %v1684
      %v1824 = vunpack.c.l.b16 %v1685
      %v1825 = vunpack.c.h.b16 %v1685
      %v1826 = vunpack.c.l.b16 %v1686
      %v1827 = vunpack.c.h.b16 %v1686
      %v1828 = vunpack.c.l.b16 %v1687
      %v1829 = vunpack.c.h.b16 %v1687
      %v1830 = vunpack.c.l.b16 %v1688
      %v1831 = vunpack.c.h.b16 %v1688
      %v1832 = vunpack.c.l.b16 %v1689
      %v1833 = vunpack.c.h.b16 %v1689
      %v1834 = vunpack.c.l.b16 %v1690
      %v1835 = vunpack.c.h.b16 %v1690
      %v1836 = vunpack.c.l.b16 %v1691
      %v1837 = vunpack.c.h.b16 %v1691
      %v1838 = vunpack.c.l.b16 %v1692
      %v1839 = vunpack.c.h.b16 %v1692
      %v1840 = vunpack.c.l.b16 %v1693
      %v1841 = vunpack.c.h.b16 %v1693
      %v1842 = vunpack.c.l.b16 %v1694
      %v1843 = vunpack.c.h.b16 %v1694
      %v1844 = vunpack.c.l.b16 %v1695
      %v1845 = vunpack.c.h.b16 %v1695
      %v1846 = vunpack.c.l.b16 %v1696
      %v1847 = vunpack.c.h.b16 %v1696
      %v1848 = vunpack.c.l.b16 %v1697
      %v1849 = vunpack.c.h.b16 %v1697
      %v1850 = vunpack.c.l.b16 %v1698
      %v1851 = vunpack.c.h.b16 %v1698
      %v1852 = vunpack.c.l.b16 %v1699
      %v1853 = vunpack.c.h.b16 %v1699
      %v1854 = vunpack.c.l.b16 %v1700
      %v1855 = vunpack.c.h.b16 %v1700
      %v1856 = vunpack.c.l.b16 %v1701
      %v1857 = vunpack.c.h.b16 %v1701
      %v1858 = vunpack.c.l.b16 %v1702
      %v1859 = vunpack.c.h.b16 %v1702
      %v1860 = vunpack.c.l.b16 %v1703
      %v1861 = vunpack.c.h.b16 %v1703
      %v1862 = vunpack.c.l.b16 %v1704
      %v1863 = vunpack.c.h.b16 %v1704
      %v1864 = vunpack.c.l.b16 %v1705
      %v1865 = vunpack.c.h.b16 %v1705
      %v1866 = vunpack.c.l.b16 %v1706
      %v1867 = vunpack.c.h.b16 %v1706
      %v1868 = vunpack.c.l.b16 %v1707
      %v1869 = vunpack.c.h.b16 %v1707
      %v1870 = vunpack.c.l.b16 %v1708
      %v1871 = vunpack.c.h.b16 %v1708
      %v1872 = vunpack.c.l.b16 %v1709
      %v1873 = vunpack.c.h.b16 %v1709
      %v1874 = vunpack.c.l.b16 %v1710
      %v1875 = vunpack.c.h.b16 %v1710
      %v1876 = vunpack.c.l.b16 %v1711
      %v1877 = vunpack.c.h.b16 %v1711
      %v1878 = vunpack.c.l.b16 %v1712
      %v1879 = vunpack.c.h.b16 %v1712
      %v1880 = vunpack.c.l.b16 %v1713
      %v1881 = vunpack.c.h.b16 %v1713
      %v1882 = vunpack.c.l.b16 %v1714
      %v1883 = vunpack.c.h.b16 %v1714
      %v1884 = vunpack.c.l.b16 %v1715
      %v1885 = vunpack.c.h.b16 %v1715
      %v1886 = vunpack.c.l.b16 %v1716
      %v1887 = vunpack.c.h.b16 %v1716
      %v1888 = vunpack.c.l.b16 %v1717
      %v1889 = vunpack.c.h.b16 %v1717
      %v1890 = vunpack.c.l.b16 %v1718
      %v1891 = vunpack.c.h.b16 %v1718
      %v1892 = vunpack.c.l.b16 %v1719
      %v1893 = vunpack.c.h.b16 %v1719
      %v1894 = vunpack.c.l.b16 %v1720
      %v1895 = vunpack.c.h.b16 %v1720
      %v1896 = vunpack.c.l.b16 %v1721
      %v1897 = vunpack.c.h.b16 %v1721
      %v1898 = vunpack.c.l.b16 %v1722
      %v1899 = vunpack.c.h.b16 %v1722
      %v1900 = vunpack.c.l.b16 %v1723
      %v1901 = vunpack.c.h.b16 %v1723
      %v1902 = vunpack.c.l.b16 %v1724
      %v1903 = vunpack.c.h.b16 %v1724
      %v1904 = vunpack.c.l.b16 %v1725
      %v1905 = vunpack.c.h.b16 %v1725
      %v1906 = vunpack.c.l.b16 %v1726
      %v1907 = vunpack.c.h.b16 %v1726
      %v1908 = vunpack.c.l.b16 %v1727
      %v1909 = vunpack.c.h.b16 %v1727
      %v1910 = vunpack.c.l.b16 %v1728
      %v1911 = vunpack.c.h.b16 %v1728
      %v1912 = vunpack.c.l.b16 %v1729
      %v1913 = vunpack.c.h.b16 %v1729
      %v1914 = vunpack.c.l.b16 %v1730
      %v1915 = vunpack.c.h.b16 %v1730
      %v1916 = vunpack.c.l.b16 %v1731
      %v1917 = vunpack.c.h.b16 %v1731
      %v1918 = vunpack.c.l.b16 %v1732
      %v1919 = vunpack.c.h.b16 %v1732
      %v1920 = vunpack.c.l.b16 %v1733
      %v1921 = vunpack.c.h.b16 %v1733
      %v1922 = vunpack.c.l.b16 %v1734
      %v1923 = vunpack.c.h.b16 %v1734
      %v1924 = vunpack.c.l.b16 %v1735
      %v1925 = vunpack.c.h.b16 %v1735
      %v1926 = vunpack.c.l.b16 %v1736
      %v1927 = vunpack.c.h.b16 %v1736
      %v1928 = vunpack.c.l.b16 %v1737
      %v1929 = vunpack.c.h.b16 %v1737
      %v1930 = vpack.c.b16 %v1802, %v1802
      %v1931 = vpack.c.b16 %v1803, %v1803
      %v1932 = vpack.c.b16 %v1804, %v1804
      %v1933 = vpack.c.b16 %v1805, %v1805
      %v1934 = vpack.c.b16 %v1806, %v1806
      %v1935 = vpack.c.b16 %v1807, %v1807
      %v1936 = vpack.c.b16 %v1808, %v1808
      %v1937 = vpack.c.b16 %v1809, %v1809
      %v1938 = vpack.c.b16 %v1810, %v1810
      %v1939 = vpack.c.b16 %v1811, %v1811
      %v1940 = vpack.c.b16 %v1812, %v1812
      %v1941 = vpack.c.b16 %v1813, %v1813
      %v1942 = vpack.c.b16 %v1814, %v1814
      %v1943 = vpack.c.b16 %v1815, %v1815
      %v1944 = vpack.c.b16 %v1816, %v1816
      %v1945 = vpack.c.b16 %v1817, %v1817
      %v1946 = vpack.c.b16 %v1818, %v1818
      %v1947 = vpack.c.b16 %v1819, %v1819
      %v1948 = vpack.c.b16 %v1820, %v1820
      %v1949 = vpack.c.b16 %v1821, %v1821
      %v1950 = vpack.c.b16 %v1822, %v1822
      %v1951 = vpack.c.b16 %v1823, %v1823
      %v1952 = vpack.c.b16 %v1824, %v1824
      %v1953 = vpack.c.b16 %v1825, %v1825
      %v1954 = vpack.c.b16 %v1826, %v1826
      %v1955 = vpack.c.b16 %v1827, %v1827
      %v1956 = vpack.c.b16 %v1828, %v1828
      %v1957 = vpack.c.b16 %v1829, %v1829
      %v1958 = vpack.c.b16 %v1830, %v1830
      %v1959 = vpack.c.b16 %v1831, %v1831
      %v1960 = vpack.c.b16 %v1832, %v1832
      %v1961 = vpack.c.b16 %v1833, %v1833
      %v1962 = vpack.c.b16 %v1834, %v1834
      %v1963 = vpack.c.b16 %v1835, %v1835
      %v1964 = vpack.c.b16 %v1836, %v1836
      %v1965 = vpack.c.b16 %v1837, %v1837
      %v1966 = vpack.c.b16 %v1838, %v1838
      %v1967 = vpack.c.b16 %v1839, %v1839
      %v1968 = vpack.c.b16 %v1840, %v1840
      %v1969 = vpack.c.b16 %v1841, %v1841
      %v1970 = vpack.c.b16 %v1842, %v1842
      %v1971 = vpack.c.b16 %v1843, %v1843
      %v1972 = vpack.c.b16 %v1844, %v1844
      %v1973 = vpack.c.b16 %v1845, %v1845
      %v1974 = vpack.c.b16 %v1846, %v1846
      %v1975 = vpack.c.b16 %v1847, %v1847
      %v1976 = vpack.c.b16 %v1848, %v1848
      %v1977 = vpack.c.b16 %v1849, %v1849
      %v1978 = vpack.c.b16 %v1850, %v1850
      %v1979 = vpack.c.b16 %v1851, %v1851
      %v1980 = vpack.c.b16 %v1852, %v1852
      %v1981 = vpack.c.b16 %v1853, %v1853
      %v1982 = vpack.c.b16 %v1854, %v1854
      %v1983 = vpack.c.b16 %v1855, %v1855
      %v1984 = vpack.c.b16 %v1856, %v1856
      %v1985 = vpack.c.b16 %v1857, %v1857
      %v1986 = vpack.c.b16 %v1858, %v1858
      %v1987 = vpack.c.b16 %v1859, %v1859
      %v1988 = vpack.c.b16 %v1860, %v1860
      %v1989 = vpack.c.b16 %v1861, %v1861
      %v1990 = vpack.c.b16 %v1862, %v1862
      %v1991 = vpack.c.b16 %v1863, %v1863
      %v1992 = vpack.c.b16 %v1864, %v1864
      %v1993 = vpack.c.b16 %v1865, %v1865
      %v1994 = vpack.c.b16 %v1866, %v1866
      %v1995 = vpack.c.b16 %v1867, %v1867
      %v1996 = vpack.c.b16 %v1868, %v1868
      %v1997 = vpack.c.b16 %v1869, %v1869
      %v1998 = vpack.c.b16 %v1870, %v1870
      %v1999 = vpack.c.b16 %v1871, %v1871
      %v2000 = vpack.c.b16 %v1872, %v1872
      %v2001 = vpack.c.b16 %v1873, %v1873
      %v2002 = vpack.c.b16 %v1874, %v1874
      %v2003 = vpack.c.b16 %v1875, %v1875
      %v2004 = vpack.c.b16 %v1876, %v1876
      %v2005 = vpack.c.b16 %v1877, %v1877
      %v2006 = vpack.c.b16 %v1878, %v1878
      %v2007 = vpack.c.b16 %v1879, %v1879
      %v2008 = vpack.c.b16 %v1880, %v1880
      %v2009 = vpack.c.b16 %v1881, %v1881
      %v2010 = vpack.c.b16 %v1882, %v1882
      %v2011 = vpack.c.b16 %v1883, %v1883
      %v2012 = vpack.c.b16 %v1884, %v1884
      %v2013 = vpack.c.b16 %v1885, %v1885
      %v2014 = vpack.c.b16 %v1886, %v1886
      %v2015 = vpack.c.b16 %v1887, %v1887
      %v2016 = vpack.c.b16 %v1888, %v1888
      %v2017 = vpack.c.b16 %v1889, %v1889
      %v2018 = vpack.c.b16 %v1890, %v1890
      %v2019 = vpack.c.b16 %v1891, %v1891
      %v2020 = vpack.c.b16 %v1892, %v1892
      %v2021 = vpack.c.b16 %v1893, %v1893
      %v2022 = vpack.c.b16 %v1894, %v1894
      %v2023 = vpack.c.b16 %v1895, %v1895
      %v2024 = vpack.c.b16 %v1896, %v1896
      %v2025 = vpack.c.b16 %v1897, %v1897
      %v2026 = vpack.c.b16 %v1898, %v1898
      %v2027 = vpack.c.b16 %v1899, %v1899
      %v2028 = vpack.c.b16 %v1900, %v1900
      %v2029 = vpack.c.b16 %v1901, %v1901
      %v2030 = vpack.c.b16 %v1902, %v1902
      %v2031 = vpack.c.b16 %v1903, %v1903
      %v2032 = vpack.c.b16 %v1904, %v1904
      %v2033 = vpack.c.b16 %v1905, %v1905
      %v2034 = vpack.c.b16 %v1906, %v1906
      %v2035 = vpack.c.b16 %v1907, %v1907
      %v2036 = vpack.c.b16 %v1908, %v1908
      %v2037 = vpack.c.b16 %v1909, %v1909
      %v2038 = vpack.c.b16 %v1910, %v1910
      %v2039 = vpack.c.b16 %v1911, %v1911
      %v2040 = vpack.c.b16 %v1912, %v1912
      %v2041 = vpack.c.b16 %v1913, %v1913
      %v2042 = vpack.c.b16 %v1914, %v1914
      %v2043 = vpack.c.b16 %v1915, %v1915
      %v2044 = vpack.c.b16 %v1916, %v1916
      %v2045 = vpack.c.b16 %v1917, %v1917
      %v2046 = vpack.c.b16 %v1918, %v1918
      %v2047 = vpack.c.b16 %v1919, %v1919
      %v2048 = vpack.c.b16 %v1920, %v1920
      %v2049 = vpack.c.b16 %v1921, %v1921
      %v2050 = vpack.c.b16 %v1922, %v1922
      %v2051 = vpack.c.b16 %v1923, %v1923
      %v2052 = vpack.c.b16 %v1924, %v1924
      %v2053 = vpack.c.b16 %v1925, %v1925
      %v2054 = vpack.c.b16 %v1926, %v1926
      %v2055 = vpack.c.b16 %v1927, %v1927
      %v2056 = vpack.c.b16 %v1928, %v1928
      %v2057 = vpack.c.b16 %v1929, %v1929
      %vm2186 = vcmask 44032
      %2187 = vst.msk [vmem:[%s172] sm:$0xf] %vm2186, %v1930
      %2188 = vst.msk [vmem:[%s172 + $0x4] sm:$0xf] %vm2186, %v1931
      %2189 = vst.msk [vmem:[%s172 + $0x8] sm:$0xf] %vm2186, %v1932
      %2190 = vst.msk [vmem:[%s172 + $0xc] sm:$0xf] %vm2186, %v1933
      %2191 = vst.msk [vmem:[%s172 + $0x10] sm:$0xf] %vm2186, %v1934
      %2192 = vst.msk [vmem:[%s172 + $0x14] sm:$0xf] %vm2186, %v1935
      %2193 = vst.msk [vmem:[%s172 + $0x18] sm:$0xf] %vm2186, %v1936
      %2194 = vst.msk [vmem:[%s172 + $0x1c] sm:$0xf] %vm2186, %v1937
      %2195 = vst.msk [vmem:[%s172 + $0x20] sm:$0xf] %vm2186, %v1938
      %2196 = vst.msk [vmem:[%s172 + $0x24] sm:$0xf] %vm2186, %v1939
      %2197 = vst.msk [vmem:[%s172 + $0x28] sm:$0xf] %vm2186, %v1940
      %2198 = vst.msk [vmem:[%s172 + $0x2c] sm:$0xf] %vm2186, %v1941
      %2199 = vst.msk [vmem:[%s172 + $0x30] sm:$0xf] %vm2186, %v1942
      %2200 = vst.msk [vmem:[%s172 + $0x34] sm:$0xf] %vm2186, %v1943
      %2201 = vst.msk [vmem:[%s172 + $0x38] sm:$0xf] %vm2186, %v1944
      %2202 = vst.msk [vmem:[%s172 + $0x3c] sm:$0xf] %vm2186, %v1945
      %2203 = vst.msk [vmem:[%s172 + $0x40] sm:$0xf] %vm2186, %v1946
      %2204 = vst.msk [vmem:[%s172 + $0x44] sm:$0xf] %vm2186, %v1947
      %2205 = vst.msk [vmem:[%s172 + $0x48] sm:$0xf] %vm2186, %v1948
      %2206 = vst.msk [vmem:[%s172 + $0x4c] sm:$0xf] %vm2186, %v1949
      %2207 = vst.msk [vmem:[%s172 + $0x50] sm:$0xf] %vm2186, %v1950
      %2208 = vst.msk [vmem:[%s172 + $0x54] sm:$0xf] %vm2186, %v1951
      %2209 = vst.msk [vmem:[%s172 + $0x58] sm:$0xf] %vm2186, %v1952
      %2210 = vst.msk [vmem:[%s172 + $0x5c] sm:$0xf] %vm2186, %v1953
      %2211 = vst.msk [vmem:[%s172 + $0x60] sm:$0xf] %vm2186, %v1954
      %2212 = vst.msk [vmem:[%s172 + $0x64] sm:$0xf] %vm2186, %v1955
      %2213 = vst.msk [vmem:[%s172 + $0x68] sm:$0xf] %vm2186, %v1956
      %2214 = vst.msk [vmem:[%s172 + $0x6c] sm:$0xf] %vm2186, %v1957
      %2215 = vst.msk [vmem:[%s172 + $0x70] sm:$0xf] %vm2186, %v1958
      %2216 = vst.msk [vmem:[%s172 + $0x74] sm:$0xf] %vm2186, %v1959
      %2217 = vst.msk [vmem:[%s172 + $0x78] sm:$0xf] %vm2186, %v1960
      %2218 = vst.msk [vmem:[%s172 + $0x7c] sm:$0xf] %vm2186, %v1961
      %2219 = vst.msk [vmem:[%s172 + $0x80] sm:$0xf] %vm2186, %v1962
      %2220 = vst.msk [vmem:[%s172 + $0x84] sm:$0xf] %vm2186, %v1963
      %2221 = vst.msk [vmem:[%s172 + $0x88] sm:$0xf] %vm2186, %v1964
      %2222 = vst.msk [vmem:[%s172 + $0x8c] sm:$0xf] %vm2186, %v1965
      %2223 = vst.msk [vmem:[%s172 + $0x90] sm:$0xf] %vm2186, %v1966
      %2224 = vst.msk [vmem:[%s172 + $0x94] sm:$0xf] %vm2186, %v1967
      %2225 = vst.msk [vmem:[%s172 + $0x98] sm:$0xf] %vm2186, %v1968
      %2226 = vst.msk [vmem:[%s172 + $0x9c] sm:$0xf] %vm2186, %v1969
      %2227 = vst.msk [vmem:[%s172 + $0xa0] sm:$0xf] %vm2186, %v1970
      %2228 = vst.msk [vmem:[%s172 + $0xa4] sm:$0xf] %vm2186, %v1971
      %2229 = vst.msk [vmem:[%s172 + $0xa8] sm:$0xf] %vm2186, %v1972
      %2230 = vst.msk [vmem:[%s172 + $0xac] sm:$0xf] %vm2186, %v1973
      %2231 = vst.msk [vmem:[%s172 + $0xb0] sm:$0xf] %vm2186, %v1974
      %2232 = vst.msk [vmem:[%s172 + $0xb4] sm:$0xf] %vm2186, %v1975
      %2233 = vst.msk [vmem:[%s172 + $0xb8] sm:$0xf] %vm2186, %v1976
      %2234 = vst.msk [vmem:[%s172 + $0xbc] sm:$0xf] %vm2186, %v1977
      %2235 = vst.msk [vmem:[%s172 + $0xc0] sm:$0xf] %vm2186, %v1978
      %2236 = vst.msk [vmem:[%s172 + $0xc4] sm:$0xf] %vm2186, %v1979
      %2237 = vst.msk [vmem:[%s172 + $0xc8] sm:$0xf] %vm2186, %v1980
      %2238 = vst.msk [vmem:[%s172 + $0xcc] sm:$0xf] %vm2186, %v1981
      %2239 = vst.msk [vmem:[%s172 + $0xd0] sm:$0xf] %vm2186, %v1982
      %2240 = vst.msk [vmem:[%s172 + $0xd4] sm:$0xf] %vm2186, %v1983
      %2241 = vst.msk [vmem:[%s172 + $0xd8] sm:$0xf] %vm2186, %v1984
      %2242 = vst.msk [vmem:[%s172 + $0xdc] sm:$0xf] %vm2186, %v1985
      %2243 = vst.msk [vmem:[%s172 + $0xe0] sm:$0xf] %vm2186, %v1986
      %2244 = vst.msk [vmem:[%s172 + $0xe4] sm:$0xf] %vm2186, %v1987
      %2245 = vst.msk [vmem:[%s172 + $0xe8] sm:$0xf] %vm2186, %v1988
      %2246 = vst.msk [vmem:[%s172 + $0xec] sm:$0xf] %vm2186, %v1989
      %2247 = vst.msk [vmem:[%s172 + $0xf0] sm:$0xf] %vm2186, %v1990
      %2248 = vst.msk [vmem:[%s172 + $0xf4] sm:$0xf] %vm2186, %v1991
      %2249 = vst.msk [vmem:[%s172 + $0xf8] sm:$0xf] %vm2186, %v1992
      %2250 = vst.msk [vmem:[%s172 + $0xfc] sm:$0xf] %vm2186, %v1993
      %2251 = vst.msk [vmem:[%s172 + $0x100] sm:$0xf] %vm2186, %v1994
      %2252 = vst.msk [vmem:[%s172 + $0x104] sm:$0xf] %vm2186, %v1995
      %2253 = vst.msk [vmem:[%s172 + $0x108] sm:$0xf] %vm2186, %v1996
      %2254 = vst.msk [vmem:[%s172 + $0x10c] sm:$0xf] %vm2186, %v1997
      %2255 = vst.msk [vmem:[%s172 + $0x110] sm:$0xf] %vm2186, %v1998
      %2256 = vst.msk [vmem:[%s172 + $0x114] sm:$0xf] %vm2186, %v1999
      %2257 = vst.msk [vmem:[%s172 + $0x118] sm:$0xf] %vm2186, %v2000
      %2258 = vst.msk [vmem:[%s172 + $0x11c] sm:$0xf] %vm2186, %v2001
      %2259 = vst.msk [vmem:[%s172 + $0x120] sm:$0xf] %vm2186, %v2002
      %2260 = vst.msk [vmem:[%s172 + $0x124] sm:$0xf] %vm2186, %v2003
      %2261 = vst.msk [vmem:[%s172 + $0x128] sm:$0xf] %vm2186, %v2004
      %2262 = vst.msk [vmem:[%s172 + $0x12c] sm:$0xf] %vm2186, %v2005
      %2263 = vst.msk [vmem:[%s172 + $0x130] sm:$0xf] %vm2186, %v2006
      %2264 = vst.msk [vmem:[%s172 + $0x134] sm:$0xf] %vm2186, %v2007
      %2265 = vst.msk [vmem:[%s172 + $0x138] sm:$0xf] %vm2186, %v2008
      %2266 = vst.msk [vmem:[%s172 + $0x13c] sm:$0xf] %vm2186, %v2009
      %2267 = vst.msk [vmem:[%s172 + $0x140] sm:$0xf] %vm2186, %v2010
      %2268 = vst.msk [vmem:[%s172 + $0x144] sm:$0xf] %vm2186, %v2011
      %2269 = vst.msk [vmem:[%s172 + $0x148] sm:$0xf] %vm2186, %v2012
      %2270 = vst.msk [vmem:[%s172 + $0x14c] sm:$0xf] %vm2186, %v2013
      %2271 = vst.msk [vmem:[%s172 + $0x150] sm:$0xf] %vm2186, %v2014
      %2272 = vst.msk [vmem:[%s172 + $0x154] sm:$0xf] %vm2186, %v2015
      %2273 = vst.msk [vmem:[%s172 + $0x158] sm:$0xf] %vm2186, %v2016
      %2274 = vst.msk [vmem:[%s172 + $0x15c] sm:$0xf] %vm2186, %v2017
      %2275 = vst.msk [vmem:[%s172 + $0x160] sm:$0xf] %vm2186, %v2018
      %2276 = vst.msk [vmem:[%s172 + $0x164] sm:$0xf] %vm2186, %v2019
      %2277 = vst.msk [vmem:[%s172 + $0x168] sm:$0xf] %vm2186, %v2020
      %2278 = vst.msk [vmem:[%s172 + $0x16c] sm:$0xf] %vm2186, %v2021
      %2279 = vst.msk [vmem:[%s172 + $0x170] sm:$0xf] %vm2186, %v2022
      %2280 = vst.msk [vmem:[%s172 + $0x174] sm:$0xf] %vm2186, %v2023
      %2281 = vst.msk [vmem:[%s172 + $0x178] sm:$0xf] %vm2186, %v2024
      %2282 = vst.msk [vmem:[%s172 + $0x17c] sm:$0xf] %vm2186, %v2025
      %2283 = vst.msk [vmem:[%s172 + $0x180] sm:$0xf] %vm2186, %v2026
      %2284 = vst.msk [vmem:[%s172 + $0x184] sm:$0xf] %vm2186, %v2027
      %2285 = vst.msk [vmem:[%s172 + $0x188] sm:$0xf] %vm2186, %v2028
      %2286 = vst.msk [vmem:[%s172 + $0x18c] sm:$0xf] %vm2186, %v2029
      %2287 = vst.msk [vmem:[%s172 + $0x190] sm:$0xf] %vm2186, %v2030
      %2288 = vst.msk [vmem:[%s172 + $0x194] sm:$0xf] %vm2186, %v2031
      %2289 = vst.msk [vmem:[%s172 + $0x198] sm:$0xf] %vm2186, %v2032
      %2290 = vst.msk [vmem:[%s172 + $0x19c] sm:$0xf] %vm2186, %v2033
      %2291 = vst.msk [vmem:[%s172 + $0x1a0] sm:$0xf] %vm2186, %v2034
      %2292 = vst.msk [vmem:[%s172 + $0x1a4] sm:$0xf] %vm2186, %v2035
      %2293 = vst.msk [vmem:[%s172 + $0x1a8] sm:$0xf] %vm2186, %v2036
      %2294 = vst.msk [vmem:[%s172 + $0x1ac] sm:$0xf] %vm2186, %v2037
      %2295 = vst.msk [vmem:[%s172 + $0x1b0] sm:$0xf] %vm2186, %v2038
      %2296 = vst.msk [vmem:[%s172 + $0x1b4] sm:$0xf] %vm2186, %v2039
      %2297 = vst.msk [vmem:[%s172 + $0x1b8] sm:$0xf] %vm2186, %v2040
      %2298 = vst.msk [vmem:[%s172 + $0x1bc] sm:$0xf] %vm2186, %v2041
      %2299 = vst.msk [vmem:[%s172 + $0x1c0] sm:$0xf] %vm2186, %v2042
      %2300 = vst.msk [vmem:[%s172 + $0x1c4] sm:$0xf] %vm2186, %v2043
      %2301 = vst.msk [vmem:[%s172 + $0x1c8] sm:$0xf] %vm2186, %v2044
      %2302 = vst.msk [vmem:[%s172 + $0x1cc] sm:$0xf] %vm2186, %v2045
      %2303 = vst.msk [vmem:[%s172 + $0x1d0] sm:$0xf] %vm2186, %v2046
      %2304 = vst.msk [vmem:[%s172 + $0x1d4] sm:$0xf] %vm2186, %v2047
      %2305 = vst.msk [vmem:[%s172 + $0x1d8] sm:$0xf] %vm2186, %v2048
      %2306 = vst.msk [vmem:[%s172 + $0x1dc] sm:$0xf] %vm2186, %v2049
      %2307 = vst.msk [vmem:[%s172 + $0x1e0] sm:$0xf] %vm2186, %v2050
      %2308 = vst.msk [vmem:[%s172 + $0x1e4] sm:$0xf] %vm2186, %v2051
      %2309 = vst.msk [vmem:[%s172 + $0x1e8] sm:$0xf] %vm2186, %v2052
      %2310 = vst.msk [vmem:[%s172 + $0x1ec] sm:$0xf] %vm2186, %v2053
      %2311 = vst.msk [vmem:[%s172 + $0x1f0] sm:$0xf] %vm2186, %v2054
      %2312 = vst.msk [vmem:[%s172 + $0x1f4] sm:$0xf] %vm2186, %v2055
      %2313 = vst.msk [vmem:[%s172 + $0x1f8] sm:$0xf] %vm2186, %v2056
      %2314 = vst.msk [vmem:[%s172 + $0x1fc] sm:$0xf] %vm2186, %v2057
      %s2315 = smul.u32 128, %s14
      %p2316 = scmp.lt.s32.totalorder %s2315, 255
      %s2317 = scalar_select %p2316, %s2315, 255
      %s2318 = smul.addr %s2317, 4
      %s2319 = scalar_lea.vmem %s3, %s2318
      // Predicated region
      $region33: #{matmul_bias_act.1} parent=31 // pred_check
        %p2320 = pneg %p100
      $region34: #{matmul_bias_act.1} parent=31 // pred_check_branch
        %2322 = sbr.rel (%p2320) target = $region36
      $region35: #{matmul_bias_act.1} parent=31 // pred_region
        %s2323 = smul.u32 128, %s14
      $region36: #{matmul_bias_act.1} parent=31 // pred_fallthru
        _
    $region32: #{matmul_bias_act.1} parent=5 // pred_fallthru
      _
    %p2324 = scmp.le.s32.totalorder 2, %s9
    // Predicated region
    $region37: #{matmul_bias_act.1} parent=5 // pred_check
      %p2325 = pneg %p2324
    $region38: #{matmul_bias_act.1} parent=5 // pred_check_branch
      %2327 = sbr.rel (%p2325) target = $region40
    $region39: #{matmul_bias_act.1} parent=5 // pred_region
      %s2328 = ssub.s32 %s9, 2
      // Predicated region
      $region41: #{matmul_bias_act.1} parent=39 // pred_check
        %p2329 = pneg %p106
      $region42: #{matmul_bias_act.1} parent=39 // pred_check_branch
        %2331 = sbr.rel (%p2329) target = $region44
      $region43: #{matmul_bias_act.1} parent=39 // pred_region
        %s2332 = smul.u32 128, %s15
        %p2333 = scmp.lt.s32.totalorder %s2332, 255
        %s2334 = scalar_select %p2333, %s2332, 255
        %s2335 = smul.addr %s2334, 4
        %s2336 = scalar_lea.vmem %s3, %s2335
      $region44: #{matmul_bias_act.1} parent=39 // pred_fallthru
        _
    $region40: #{matmul_bias_act.1} parent=5 // pred_fallthru
      _
  $region6: #{matmul_bias_act.1} parent=0 // loop_footer
    %s13 = sadd.s32 1, %s9
  $region7: #{matmul_bias_act.1} parent=0 // loop_footer_branch
    %8 = sbr.rel target = $region3
  $region8: #{matmul_bias_act.1} parent=0 // loop_exit
    _

</llo_original>
